<compile_context>
chip_gen: v7x
topology: tpu7x:2x2x1
jax: 0.10.0
libtpu: 0.0.40
codegen_flags: <defaults>
</compile_context>

<pallas_src>
import functools

import jax
import jax.numpy as jnp
from jax.experimental import pallas as pl
from jax.experimental.pallas import tpu as pltpu

EXPANSION = 4


def _round_up(x, m):
    return (x + m - 1) // m * m


# ----------------------------- Pallas kernel ------------------------------ #

def _bottleneck_kernel(*refs, stride, Ho, Wo, has_proj, cout_pad):
    if has_proj:
        (x_ref, w1_ref, b1_ref, w2_ref, b2_ref, w3_ref, b3_ref,
         ws_ref, bs_ref, o_ref, *scratch) = refs
    else:
        (x_ref, w1_ref, b1_ref, w2_ref, b2_ref, w3_ref, b3_ref,
         o_ref, *scratch) = refs
        ws_ref = bs_ref = None
    y1p_ref = scratch[0]
    xs32_ref = scratch[1] if len(scratch) > 1 else None

    H, W, cin = x_ref.shape
    Hp, Wp, planes = y1p_ref.shape
    Mo = Ho * Wo

    xb = x_ref[...]                                    # (H, W, cin) bf16

    # ---- conv1 (1x1) + bn1 + relu ------------------------------------- #
    y1 = jnp.dot(xb.reshape(H * W, cin), w1_ref[...],
                 preferred_element_type=jnp.float32)
    y1 = jnp.maximum(y1 + b1_ref[...], 0.0).reshape(H, W, planes)

    # Assemble the zero-padded frame in registers (single aligned full-frame
    # store; the halo zeros give conv2 its padding=1).  Scratch kept f32
    # (VMEM-only, never touches HBM) so strided window reads stay 32-bit.
    row = jnp.concatenate(
        [jnp.zeros((H, 1, planes), jnp.float32), y1,
         jnp.zeros((H, Wp - W - 1, planes), jnp.float32)], axis=1)
    y1p_ref[...] = jnp.concatenate(
        [jnp.zeros((1, Wp, planes), jnp.float32), row,
         jnp.zeros((Hp - H - 1, Wp, planes), jnp.float32)], axis=0)

    # ---- conv2 (3x3, stride, pad=1) + bn2 + relu ------------------------ #
    # One large-K matmul over the 9 concatenated taps (K = 9*planes) instead
    # of nine small K=planes dots with VPU-side accumulation.
    taps = []
    for kh in range(3):
        for kw in range(3):
            if stride == 1:
                win = y1p_ref[pl.ds(kh, Ho), pl.ds(kw, Wo), :]
            else:
                win = y1p_ref[pl.ds(kh, Ho, stride=stride),
                              pl.ds(kw, Wo, stride=stride), :]
            taps.append(win.reshape(Mo, planes).astype(jnp.bfloat16))
    patch = jnp.concatenate(taps, axis=-1)             # (Mo, 9*planes) bf16
    y2 = jnp.dot(patch, w2_ref[...], preferred_element_type=jnp.float32)
    y2 = jnp.maximum(y2 + b2_ref[...], 0.0)

    # ---- conv3 (1x1) + bn3 ---------------------------------------------- #
    y3 = jnp.dot(y2.astype(jnp.bfloat16), w3_ref[...],
                 preferred_element_type=jnp.float32) + b3_ref[...]

    # ---- shortcut (identity or 1x1 projection), from the resident x tile - #
    if has_proj:
        if stride == 1:
            xsc = xb.reshape(Mo, cin)
        else:
            xs32_ref[...] = xb.astype(jnp.float32)
            xsc = xs32_ref[pl.ds(0, Ho, stride=stride),
                           pl.ds(0, Wo, stride=stride), :]
            xsc = xsc.reshape(Mo, cin).astype(jnp.bfloat16)
        sc = jnp.dot(xsc, ws_ref[...],
                     preferred_element_type=jnp.float32) + bs_ref[...]
    else:
        sc = xb.reshape(Mo, cin).astype(jnp.float32)
        if cout_pad:
            sc = jnp.concatenate(
                [sc, jnp.zeros((Mo, cout_pad), jnp.float32)], axis=-1)

    o_ref[...] = jnp.maximum(y3 + sc, 0.0).astype(o_ref.dtype)


# ------------------------------- JAX glue ---------------------------------- #

def _fold_bn(gamma, beta, mean, var, eps=1e-5):
    scale = gamma / jnp.sqrt(var + eps)
    bias = beta - mean * scale
    return scale, bias


def _resident_spec(a):
    zeros = (0,) * a.ndim
    return pl.BlockSpec(a.shape, lambda i: zeros)


def _padded_bytes(shape, itemsize=4):
    """VMEM footprint of one buffer, padded to (8, 128) tiling."""
    lanes = _round_up(shape[-1], 128)
    subl = _round_up(shape[-2], 8) if len(shape) > 1 else 8
    lead = 1
    for d in shape[:-2]:
        lead *= d
    return lead * subl * lanes * itemsize


def bottleneck_forward(x_nchw, params, stride):
    """Pallas implementation of Bottleneck.forward (eval-mode BN)."""
    x = jnp.transpose(x_nchw, (0, 2, 3, 1)).astype(jnp.bfloat16)   # NHWC bf16
    N, H, W, cin = x.shape
    planes = params["w1"].shape[0]
    out_c = EXPANSION * planes
    s = int(stride)
    Ho = (H - 1) // s + 1
    Wo = (W - 1) // s + 1
    Mo = Ho * Wo
    Hp = H + 2
    Wp = _round_up(W + 2, 8)
    has_proj = (s != 1) or (cin != out_c)

    # Lane padding of the output only when out_c is already large; for small
    # out_c, write exactly out_c lanes (masked store beats 8x HBM writeback).
    coutp = out_c if out_c < 128 else _round_up(out_c, 128)
    cout_pad = coutp - out_c

    s1, b1 = _fold_bn(*params["bn1"])
    s2, b2 = _fold_bn(*params["bn2"])
    s3, b3 = _fold_bn(*params["bn3"])

    # Fold BN scales into conv weights; cast weights to bf16 (bias stays f32).
    w1m = (params["w1"][:, :, 0, 0].T * s1[None, :]).astype(jnp.bfloat16)
    w2m = (jnp.transpose(params["w2"], (2, 3, 1, 0)) * s2).reshape(
        9 * planes, planes).astype(jnp.bfloat16)        # rows ordered (kh,kw,ci)
    w3m = params["w3"][:, :, 0, 0].T * s3[None, :]
    b3m = b3[None, :]
    if cout_pad:
        w3m = jnp.pad(w3m, ((0, 0), (0, cout_pad)))
        b3m = jnp.pad(b3m, ((0, 0), (0, cout_pad)))
    w3m = w3m.astype(jnp.bfloat16)
    b1m = b1[None, :]
    b2m = b2[None, :]

    weight_args = [w1m, b1m, w2m, b2m, w3m, b3m]
    if has_proj:
        ss, bs = _fold_bn(*params["bns"])
        wsm = params["ws"][:, :, 0, 0].T * ss[None, :]
        bsm = bs[None, :]
        if cout_pad:
            wsm = jnp.pad(wsm, ((0, 0), (0, cout_pad)))
            bsm = jnp.pad(bsm, ((0, 0), (0, cout_pad)))
        weight_args += [wsm.astype(jnp.bfloat16), bsm]

    args = [x] + weight_args
    in_specs = ([pl.BlockSpec((None, H, W, cin), lambda i: (i, 0, 0, 0))]
                + [_resident_spec(a) for a in weight_args])

    scratch_shapes = [pltpu.VMEM((Hp, Wp, planes), jnp.float32)]
    if has_proj and s > 1:
        scratch_shapes.append(pltpu.VMEM((H, W, cin), jnp.float32))

    kernel = functools.partial(_bottleneck_kernel, stride=s, Ho=Ho, Wo=Wo,
                               has_proj=has_proj, cout_pad=cout_pad)

    # VMEM budget: double-buffered per-image blocks + resident weights +
    # scratches; clamp to <= 75% of this generation's physical VMEM.
    est = (2 * (_padded_bytes((H, W, cin), 2) + _padded_bytes((Mo, coutp), 4))
           + sum(_padded_bytes(a.shape, a.dtype.itemsize) for a in weight_args)
           + _padded_bytes((Hp, Wp, planes), 4)
           + (_padded_bytes((H, W, cin), 4) if (has_proj and s > 1) else 0))
    try:
        vmem_cap = int(pltpu.get_tpu_info().vmem_capacity_bytes)
    except Exception:
        vmem_cap = 64 * 2**20
    vmem_limit = int(min(int(0.75 * vmem_cap), max(16 * 2**20, 2 * est)))

    flops = 2 * N * (H * W * cin * planes
                     + Mo * 9 * planes * planes
                     + Mo * planes * out_c
                     + (Mo * cin * out_c if has_proj else 0))
    bytes_accessed = (x.size * 2
                      + sum(int(a.size) * a.dtype.itemsize for a in weight_args)
                      + N * Mo * coutp * 4)

    out_flat = pl.pallas_call(
        kernel,
        out_shape=jax.ShapeDtypeStruct((N, Mo, coutp), jnp.float32),
        grid=(N,),
        in_specs=in_specs,
        out_specs=pl.BlockSpec((None, Mo, coutp), lambda i: (i, 0, 0)),
        scratch_shapes=scratch_shapes,
        compiler_params=pltpu.CompilerParams(
            dimension_semantics=("parallel",),
            vmem_limit_bytes=vmem_limit),
        cost_estimate=pl.CostEstimate(flops=flops, transcendentals=0,
                                      bytes_accessed=bytes_accessed),
    )(*args)

    out = out_flat[:, :, :out_c] if cout_pad else out_flat
    out = out.reshape(N, Ho, Wo, out_c)
    return jnp.transpose(out, (0, 3, 1, 2)).astype(x_nchw.dtype)   # -> NCHW


# ---------------------------- reference (JAX) ------------------------------ #

def bottleneck_reference(x_nchw, params, stride):
    def conv(x, w, s, pad):
        return jax.lax.conv_general_dilated(
            x, w, (s, s), pad,
            dimension_numbers=("NCHW", "OIHW", "NCHW"),
            precision=jax.lax.Precision.HIGHEST)

    def bn(x, p, eps=1e-5):
        g, b, m, v = (t[None, :, None, None] for t in p)
        return (x - m) / jnp.sqrt(v + eps) * g + b

    out = jax.nn.relu(bn(conv(x_nchw, params["w1"], 1, ((0, 0), (0, 0))),
                         params["bn1"]))
    out = jax.nn.relu(bn(conv(out, params["w2"], stride, ((1, 1), (1, 1))),
                         params["bn2"]))
    out = bn(conv(out, params["w3"], 1, ((0, 0), (0, 0))), params["bn3"])
    planes = params["w1"].shape[0]
    if stride != 1 or x_nchw.shape[1] != EXPANSION * planes:
        sc = bn(conv(x_nchw, params["ws"], stride, ((0, 0), (0, 0))),
                params["bns"])
    else:
        sc = x_nchw
    return jax.nn.relu(out + sc)


# --------------------------------- main ------------------------------------ #

def init_params(key, in_planes, planes):
    out_c = EXPANSION * planes
    ks = jax.random.split(key, 8)

    def bn_params(k, c):
        k1, k2, k3, k4 = jax.random.split(k, 4)
        gamma = 1.0 + 0.1 * jax.random.normal(k1, (c,), jnp.float32)
        beta = 0.1 * jax.random.normal(k2, (c,), jnp.float32)
        mean = 0.1 * jax.random.normal(k3, (c,), jnp.float32)
        var = jax.random.uniform(k4, (c,), jnp.float32, 0.5, 1.5)
        return (gamma, beta, mean, var)

    return {
        "w1": 0.2 * jax.random.normal(ks[0], (planes, in_planes, 1, 1), jnp.float32),
        "w2": 0.2 * jax.random.normal(ks[1], (planes, planes, 3, 3), jnp.float32),
        "w3": 0.2 * jax.random.normal(ks[2], (out_c, planes, 1, 1), jnp.float32),
        "ws": 0.2 * jax.random.normal(ks[3], (out_c, in_planes, 1, 1), jnp.float32),
        "bn1": bn_params(ks[4], planes),
        "bn2": bn_params(ks[5], planes),
        "bn3": bn_params(ks[6], out_c),
        "bns": bn_params(ks[7], out_c),
    }


if __name__ == "__main__":
    key = jax.random.PRNGKey(0)
    k_x, k_p = jax.random.split(key)

    # Bottleneck(in_planes=4, planes=4, stride=2) -> output channels 16
    N, Cin, H, W = 2, 4, 16, 16
    planes, stride = 4, 2

    x = jax.random.normal(k_x, (N, Cin, H, W), jnp.float32)
    params = init_params(k_p, Cin, planes)

    fwd = jax.jit(bottleneck_forward, static_argnums=(2,))
    out = jax.block_until_ready(fwd(x, params, stride))
    ref = jax.block_until_ready(bottleneck_reference(x, params, stride))

    assert out.shape == (N, EXPANSION * planes, H // stride, W // stride), out.shape
    # Kernel runs bf16 MXU passes with f32 accumulation; the reference is
    # f32 HIGHEST, so the tolerance is bf16-level.
    max_err = float(jnp.max(jnp.abs(out - ref)))
    assert jnp.allclose(out, ref, atol=5e-2, rtol=5e-2), max_err

    print("KERNEL_OK")
</pallas_src>

<mosaic_0001>
module attributes {stable_mosaic.version = 11 : i64} {
  func.func @_bottleneck_kernel(%arg0: i32, %arg1: memref<1x16x16x4xbf16, #tpu.memory_space<vmem>>, %arg2: memref<4x4xbf16, #tpu.memory_space<vmem>>, %arg3: memref<1x4xf32, #tpu.memory_space<vmem>>, %arg4: memref<36x4xbf16, #tpu.memory_space<vmem>>, %arg5: memref<1x4xf32, #tpu.memory_space<vmem>>, %arg6: memref<4x16xbf16, #tpu.memory_space<vmem>>, %arg7: memref<1x16xf32, #tpu.memory_space<vmem>>, %arg8: memref<4x16xbf16, #tpu.memory_space<vmem>>, %arg9: memref<1x16xf32, #tpu.memory_space<vmem>>, %arg10: memref<1x64x16xf32, #tpu.memory_space<vmem>>, %arg11: memref<18x24x4xf32, #tpu.memory_space<vmem>>, %arg12: memref<16x16x4xf32, #tpu.memory_space<vmem>>) attributes {dimension_semantics = [#tpu.dimension_semantics<parallel>], iteration_bounds = array<i64: 2>, scalar_prefetch = 0 : i64, scratch_operands = 2 : i64, tpu.core_type = #tpu.core_type<tc>, window_params = [{transform_indices = @transform_0, window_bounds = array<i64: 1, 16, 16, 4>}, {pipeline_mode = #tpu.pipeline_mode<synchronous>, transform_indices = @transform_1, window_bounds = array<i64: 4, 4>}, {pipeline_mode = #tpu.pipeline_mode<synchronous>, transform_indices = @transform_2, window_bounds = array<i64: 1, 4>}, {pipeline_mode = #tpu.pipeline_mode<synchronous>, transform_indices = @transform_3, window_bounds = array<i64: 36, 4>}, {pipeline_mode = #tpu.pipeline_mode<synchronous>, transform_indices = @transform_4, window_bounds = array<i64: 1, 4>}, {pipeline_mode = #tpu.pipeline_mode<synchronous>, transform_indices = @transform_5, window_bounds = array<i64: 4, 16>}, {pipeline_mode = #tpu.pipeline_mode<synchronous>, transform_indices = @transform_6, window_bounds = array<i64: 1, 16>}, {pipeline_mode = #tpu.pipeline_mode<synchronous>, transform_indices = @transform_7, window_bounds = array<i64: 4, 16>}, {pipeline_mode = #tpu.pipeline_mode<synchronous>, transform_indices = @transform_8, window_bounds = array<i64: 1, 16>}, {transform_indices = @transform_9, window_bounds = array<i64: 1, 64, 16>}]} {
    %c0 = arith.constant 0 : index
    %c0_0 = arith.constant 0 : index
    %c0_1 = arith.constant 0 : index
    %c0_2 = arith.constant 0 : index
    %0 = vector.load %arg1[%c0, %c0_0, %c0_1, %c0_2] : memref<1x16x16x4xbf16, #tpu.memory_space<vmem>>, vector<1x16x16x4xbf16>
    %1 = vector.shape_cast %0 : vector<1x16x16x4xbf16> to vector<16x16x4xbf16>
    %2 = vector.shape_cast %1 : vector<16x16x4xbf16> to vector<256x4xbf16>
    %c0_3 = arith.constant 0 : index
    %c0_4 = arith.constant 0 : index
    %3 = vector.load %arg2[%c0_3, %c0_4] : memref<4x4xbf16, #tpu.memory_space<vmem>>, vector<4x4xbf16>
    %cst = arith.constant dense<0.000000e+00> : vector<256x4xf32>
    %4 = tpu.matmul %2, %3, %cst {dimension_numbers = #tpu.dot_dimension_numbers<[1], [0], [0], [1], [0, 0, 1, 1], [], []>} : vector<256x4xbf16>, vector<4x4xbf16>, vector<256x4xf32> -> vector<256x4xf32>
    %c0_5 = arith.constant 0 : index
    %c0_6 = arith.constant 0 : index
    %5 = vector.load %arg3[%c0_5, %c0_6] : memref<1x4xf32, #tpu.memory_space<vmem>>, vector<1x4xf32>
    %6 = vector.broadcast %5 : vector<1x4xf32> to vector<256x4xf32>
    %7 = arith.addf %4, %6 : vector<256x4xf32>
    %cst_7 = arith.constant 0.000000e+00 : f32
    %8 = vector.broadcast %cst_7 : f32 to vector<256x4xf32>
    %9 = arith.maximumf %7, %8 : vector<256x4xf32>
    %10 = vector.shape_cast %9 : vector<256x4xf32> to vector<16x16x4xf32>
    %cst_8 = arith.constant 0.000000e+00 : f32
    %11 = vector.broadcast %cst_8 : f32 to vector<16x1x4xf32>
    %cst_9 = arith.constant 0.000000e+00 : f32
    %12 = vector.broadcast %cst_9 : f32 to vector<16x7x4xf32>
    %13 = tpu.concatenate %11, %10, %12 in 1 : vector<16x1x4xf32>, vector<16x16x4xf32>, vector<16x7x4xf32> -> vector<16x24x4xf32>
    %cst_10 = arith.constant 0.000000e+00 : f32
    %14 = vector.broadcast %cst_10 : f32 to vector<1x24x4xf32>
    %cst_11 = arith.constant 0.000000e+00 : f32
    %15 = vector.broadcast %cst_11 : f32 to vector<1x24x4xf32>
    %16 = tpu.concatenate %14, %13, %15 in 0 : vector<1x24x4xf32>, vector<16x24x4xf32>, vector<1x24x4xf32> -> vector<18x24x4xf32>
    %c0_12 = arith.constant 0 : index
    %c0_13 = arith.constant 0 : index
    %c0_14 = arith.constant 0 : index
    %17 = vector.load %arg11[%c0_12, %c0_13, %c0_14] : memref<18x24x4xf32, #tpu.memory_space<vmem>>, vector<18x24x4xf32>
    tpu.vector_store %arg11[%c0_12, %c0_13, %c0_14], %16 {strides = array<i32>} : memref<18x24x4xf32, #tpu.memory_space<vmem>>, vector<18x24x4xf32>,
    %c0_15 = arith.constant 0 : index
    %c0_16 = arith.constant 0 : index
    %c0_17 = arith.constant 0 : index
    %18 = tpu.strided_load %arg11[%c0_15, %c0_16, %c0_17] {strides = array<i32: 2, 2, 1>} : memref<18x24x4xf32, #tpu.memory_space<vmem>>, vector<8x8x4xf32>
    %19 = vector.shape_cast %18 : vector<8x8x4xf32> to vector<64x4xf32>
    %20 = arith.truncf %19 : vector<64x4xf32> to vector<64x4xbf16>
    %c0_18 = arith.constant 0 : index
    %c1 = arith.constant 1 : index
    %c0_19 = arith.constant 0 : index
    %21 = tpu.strided_load %arg11[%c0_18, %c1, %c0_19] {strides = array<i32: 2, 2, 1>} : memref<18x24x4xf32, #tpu.memory_space<vmem>>, vector<8x8x4xf32>
    %22 = vector.shape_cast %21 : vector<8x8x4xf32> to vector<64x4xf32>
    %23 = arith.truncf %22 : vector<64x4xf32> to vector<64x4xbf16>
    %c0_20 = arith.constant 0 : index
    %c2 = arith.constant 2 : index
    %c0_21 = arith.constant 0 : index
    %24 = tpu.strided_load %arg11[%c0_20, %c2, %c0_21] {strides = array<i32: 2, 2, 1>} : memref<18x24x4xf32, #tpu.memory_space<vmem>>, vector<8x8x4xf32>
    %25 = vector.shape_cast %24 : vector<8x8x4xf32> to vector<64x4xf32>
    %26 = arith.truncf %25 : vector<64x4xf32> to vector<64x4xbf16>
    %c1_22 = arith.constant 1 : index
    %c0_23 = arith.constant 0 : index
    %c0_24 = arith.constant 0 : index
    %27 = tpu.strided_load %arg11[%c1_22, %c0_23, %c0_24] {strides = array<i32: 2, 2, 1>} : memref<18x24x4xf32, #tpu.memory_space<vmem>>, vector<8x8x4xf32>
    %28 = vector.shape_cast %27 : vector<8x8x4xf32> to vector<64x4xf32>
    %29 = arith.truncf %28 : vector<64x4xf32> to vector<64x4xbf16>
    %c1_25 = arith.constant 1 : index
    %c1_26 = arith.constant 1 : index
    %c0_27 = arith.constant 0 : index
    %30 = tpu.strided_load %arg11[%c1_25, %c1_26, %c0_27] {strides = array<i32: 2, 2, 1>} : memref<18x24x4xf32, #tpu.memory_space<vmem>>, vector<8x8x4xf32>
    %31 = vector.shape_cast %30 : vector<8x8x4xf32> to vector<64x4xf32>
    %32 = arith.truncf %31 : vector<64x4xf32> to vector<64x4xbf16>
    %c1_28 = arith.constant 1 : index
    %c2_29 = arith.constant 2 : index
    %c0_30 = arith.constant 0 : index
    %33 = tpu.strided_load %arg11[%c1_28, %c2_29, %c0_30] {strides = array<i32: 2, 2, 1>} : memref<18x24x4xf32, #tpu.memory_space<vmem>>, vector<8x8x4xf32>
    %34 = vector.shape_cast %33 : vector<8x8x4xf32> to vector<64x4xf32>
    %35 = arith.truncf %34 : vector<64x4xf32> to vector<64x4xbf16>
    %c2_31 = arith.constant 2 : index
    %c0_32 = arith.constant 0 : index
    %c0_33 = arith.constant 0 : index
    %36 = tpu.strided_load %arg11[%c2_31, %c0_32, %c0_33] {strides = array<i32: 2, 2, 1>} : memref<18x24x4xf32, #tpu.memory_space<vmem>>, vector<8x8x4xf32>
    %37 = vector.shape_cast %36 : vector<8x8x4xf32> to vector<64x4xf32>
    %38 = arith.truncf %37 : vector<64x4xf32> to vector<64x4xbf16>
    %c2_34 = arith.constant 2 : index
    %c1_35 = arith.constant 1 : index
    %c0_36 = arith.constant 0 : index
    %39 = tpu.strided_load %arg11[%c2_34, %c1_35, %c0_36] {strides = array<i32: 2, 2, 1>} : memref<18x24x4xf32, #tpu.memory_space<vmem>>, vector<8x8x4xf32>
    %40 = vector.shape_cast %39 : vector<8x8x4xf32> to vector<64x4xf32>
    %41 = arith.truncf %40 : vector<64x4xf32> to vector<64x4xbf16>
    %c2_37 = arith.constant 2 : index
    %c2_38 = arith.constant 2 : index
    %c0_39 = arith.constant 0 : index
    %42 = tpu.strided_load %arg11[%c2_37, %c2_38, %c0_39] {strides = array<i32: 2, 2, 1>} : memref<18x24x4xf32, #tpu.memory_space<vmem>>, vector<8x8x4xf32>
    %43 = vector.shape_cast %42 : vector<8x8x4xf32> to vector<64x4xf32>
    %44 = arith.truncf %43 : vector<64x4xf32> to vector<64x4xbf16>
    %45 = tpu.concatenate %20, %23, %26, %29, %32, %35, %38, %41, %44 in 1 : vector<64x4xbf16>, vector<64x4xbf16>, vector<64x4xbf16>, vector<64x4xbf16>, vector<64x4xbf16>, vector<64x4xbf16>, vector<64x4xbf16>, vector<64x4xbf16>, vector<64x4xbf16> -> vector<64x36xbf16>
    %c0_40 = arith.constant 0 : index
    %c0_41 = arith.constant 0 : index
    %46 = vector.load %arg4[%c0_40, %c0_41] : memref<36x4xbf16, #tpu.memory_space<vmem>>, vector<36x4xbf16>
    %cst_42 = arith.constant dense<0.000000e+00> : vector<64x4xf32>
    %47 = tpu.matmul %45, %46, %cst_42 {dimension_numbers = #tpu.dot_dimension_numbers<[1], [0], [0], [1], [0, 0, 1, 1], [], []>} : vector<64x36xbf16>, vector<36x4xbf16>, vector<64x4xf32> -> vector<64x4xf32>
    %c0_43 = arith.constant 0 : index
    %c0_44 = arith.constant 0 : index
    %48 = vector.load %arg5[%c0_43, %c0_44] : memref<1x4xf32, #tpu.memory_space<vmem>>, vector<1x4xf32>
    %49 = vector.broadcast %48 : vector<1x4xf32> to vector<64x4xf32>
    %50 = arith.addf %47, %49 : vector<64x4xf32>
    %cst_45 = arith.constant 0.000000e+00 : f32
    %51 = vector.broadcast %cst_45 : f32 to vector<64x4xf32>
    %52 = arith.maximumf %50, %51 : vector<64x4xf32>
    %53 = arith.truncf %52 : vector<64x4xf32> to vector<64x4xbf16>
    %c0_46 = arith.constant 0 : index
    %c0_47 = arith.constant 0 : index
    %54 = vector.load %arg6[%c0_46, %c0_47] : memref<4x16xbf16, #tpu.memory_space<vmem>>, vector<4x16xbf16>
    %cst_48 = arith.constant dense<0.000000e+00> : vector<64x16xf32>
    %55 = tpu.matmul %53, %54, %cst_48 {dimension_numbers = #tpu.dot_dimension_numbers<[1], [0], [0], [1], [0, 0, 1, 1], [], []>} : vector<64x4xbf16>, vector<4x16xbf16>, vector<64x16xf32> -> vector<64x16xf32>
    %c0_49 = arith.constant 0 : index
    %c0_50 = arith.constant 0 : index
    %56 = vector.load %arg7[%c0_49, %c0_50] : memref<1x16xf32, #tpu.memory_space<vmem>>, vector<1x16xf32>
    %57 = vector.broadcast %56 : vector<1x16xf32> to vector<64x16xf32>
    %58 = arith.addf %55, %57 : vector<64x16xf32>
    %59 = arith.extf %1 : vector<16x16x4xbf16> to vector<16x16x4xf32>
    %c0_51 = arith.constant 0 : index
    %c0_52 = arith.constant 0 : index
    %c0_53 = arith.constant 0 : index
    %60 = vector.load %arg12[%c0_51, %c0_52, %c0_53] : memref<16x16x4xf32, #tpu.memory_space<vmem>>, vector<16x16x4xf32>
    tpu.vector_store %arg12[%c0_51, %c0_52, %c0_53], %59 {strides = array<i32>} : memref<16x16x4xf32, #tpu.memory_space<vmem>>, vector<16x16x4xf32>,
    %c0_54 = arith.constant 0 : index
    %c0_55 = arith.constant 0 : index
    %c0_56 = arith.constant 0 : index
    %61 = tpu.strided_load %arg12[%c0_54, %c0_55, %c0_56] {strides = array<i32: 2, 2, 1>} : memref<16x16x4xf32, #tpu.memory_space<vmem>>, vector<8x8x4xf32>
    %62 = vector.shape_cast %61 : vector<8x8x4xf32> to vector<64x4xf32>
    %63 = arith.truncf %62 : vector<64x4xf32> to vector<64x4xbf16>
    %c0_57 = arith.constant 0 : index
    %c0_58 = arith.constant 0 : index
    %64 = vector.load %arg8[%c0_57, %c0_58] : memref<4x16xbf16, #tpu.memory_space<vmem>>, vector<4x16xbf16>
    %cst_59 = arith.constant dense<0.000000e+00> : vector<64x16xf32>
    %65 = tpu.matmul %63, %64, %cst_59 {dimension_numbers = #tpu.dot_dimension_numbers<[1], [0], [0], [1], [0, 0, 1, 1], [], []>} : vector<64x4xbf16>, vector<4x16xbf16>, vector<64x16xf32> -> vector<64x16xf32>
    %c0_60 = arith.constant 0 : index
    %c0_61 = arith.constant 0 : index
    %66 = vector.load %arg9[%c0_60, %c0_61] : memref<1x16xf32, #tpu.memory_space<vmem>>, vector<1x16xf32>
    %67 = vector.broadcast %66 : vector<1x16xf32> to vector<64x16xf32>
    %68 = arith.addf %65, %67 : vector<64x16xf32>
    %69 = arith.addf %58, %68 : vector<64x16xf32>
    %cst_62 = arith.constant 0.000000e+00 : f32
    %70 = vector.broadcast %cst_62 : f32 to vector<64x16xf32>
    %71 = arith.maximumf %69, %70 : vector<64x16xf32>
    %c0_63 = arith.constant 0 : index
    %c0_64 = arith.constant 0 : index
    %c0_65 = arith.constant 0 : index
    %72 = vector.load %arg10[%c0_63, %c0_64, %c0_65] : memref<1x64x16xf32, #tpu.memory_space<vmem>>, vector<1x64x16xf32>
    %73 = vector.shape_cast %72 : vector<1x64x16xf32> to vector<64x16xf32>
    %74 = vector.shape_cast %71 : vector<64x16xf32> to vector<1x64x16xf32>
    tpu.vector_store %arg10[%c0_63, %c0_64, %c0_65], %74 {strides = array<i32>} : memref<1x64x16xf32, #tpu.memory_space<vmem>>, vector<1x64x16xf32>,
    return
  }
  func.func @transform_0(%arg0: i32) -> (i32, i32, i32, i32) {
    %c0_i32 = arith.constant 0 : i32
    %c0_i32_0 = arith.constant 0 : i32
    %c0_i32_1 = arith.constant 0 : i32
    %c0_i32_2 = arith.constant 0 : i32
    return %arg0, %c0_i32, %c0_i32_0, %c0_i32_1 : i32, i32, i32, i32
  }
  func.func @transform_1(%arg0: i32) -> (i32, i32) {
    %c0_i32 = arith.constant 0 : i32
    %c0_i32_0 = arith.constant 0 : i32
    %c0_i32_1 = arith.constant 0 : i32
    return %c0_i32, %c0_i32_0 : i32, i32
  }
  func.func @transform_2(%arg0: i32) -> (i32, i32) {
    %c0_i32 = arith.constant 0 : i32
    %c0_i32_0 = arith.constant 0 : i32
    %c0_i32_1 = arith.constant 0 : i32
    return %c0_i32, %c0_i32_0 : i32, i32
  }
  func.func @transform_3(%arg0: i32) -> (i32, i32) {
    %c0_i32 = arith.constant 0 : i32
    %c0_i32_0 = arith.constant 0 : i32
    %c0_i32_1 = arith.constant 0 : i32
    return %c0_i32, %c0_i32_0 : i32, i32
  }
  func.func @transform_4(%arg0: i32) -> (i32, i32) {
    %c0_i32 = arith.constant 0 : i32
    %c0_i32_0 = arith.constant 0 : i32
    %c0_i32_1 = arith.constant 0 : i32
    return %c0_i32, %c0_i32_0 : i32, i32
  }
  func.func @transform_5(%arg0: i32) -> (i32, i32) {
    %c0_i32 = arith.constant 0 : i32
    %c0_i32_0 = arith.constant 0 : i32
    %c0_i32_1 = arith.constant 0 : i32
    return %c0_i32, %c0_i32_0 : i32, i32
  }
  func.func @transform_6(%arg0: i32) -> (i32, i32) {
    %c0_i32 = arith.constant 0 : i32
    %c0_i32_0 = arith.constant 0 : i32
    %c0_i32_1 = arith.constant 0 : i32
    return %c0_i32, %c0_i32_0 : i32, i32
  }
  func.func @transform_7(%arg0: i32) -> (i32, i32) {
    %c0_i32 = arith.constant 0 : i32
    %c0_i32_0 = arith.constant 0 : i32
    %c0_i32_1 = arith.constant 0 : i32
    return %c0_i32, %c0_i32_0 : i32, i32
  }
  func.func @transform_8(%arg0: i32) -> (i32, i32) {
    %c0_i32 = arith.constant 0 : i32
    %c0_i32_0 = arith.constant 0 : i32
    %c0_i32_1 = arith.constant 0 : i32
    return %c0_i32, %c0_i32_0 : i32, i32
  }
  func.func @transform_9(%arg0: i32) -> (i32, i32, i32) {
    %c0_i32 = arith.constant 0 : i32
    %c0_i32_0 = arith.constant 0 : i32
    %c0_i32_1 = arith.constant 0 : i32
    return %arg0, %c0_i32, %c0_i32_0 : i32, i32, i32
  }
}

</mosaic_0001>

<llo_original>
// kernel: bottleneck_forward.1
$region0: #{bottleneck_forward.1}
  #allocation0 [shape = 'u32[]', space=smem, size = 0x4, offset = 0x4, fixed_abs, tag = 'smem constant byte address 0x4 - core index']
  #allocation1 [shape = 'u32[144,128]{1,0:T(1,128)}', space=vmem, size = 0x12000, scoped, tag = 'internal scratch']
  #allocation2 [shape = 'f32[18,24,4]{2,1,0:T(8,128)}', space=vmem, size = 0x36000, scoped, tag = 'scratch operand']
  #allocation3 [shape = 'f32[16,16,4]{2,1,0:T(8,128)}', space=vmem, size = 0x20000, scoped, tag = 'scratch operand']
  %s0 = inlined_call_operand.vmem [shape: bf16[2,16,16,4], index: 0, kind: input, shape index: {}]
  %s1 = inlined_call_operand.vmem [shape: bf16[4,4], index: 1, kind: input, shape index: {}]
  %s2 = inlined_call_operand.vmem [shape: f32[1,4], index: 2, kind: input, shape index: {}]
  %s3 = inlined_call_operand.vmem [shape: bf16[36,4], index: 3, kind: input, shape index: {}]
  %s4 = inlined_call_operand.vmem [shape: f32[1,4], index: 4, kind: input, shape index: {}]
  %s5 = inlined_call_operand.vmem [shape: bf16[4,16], index: 5, kind: input, shape index: {}]
  %s6 = inlined_call_operand.vmem [shape: f32[1,16], index: 6, kind: input, shape index: {}]
  %s7 = inlined_call_operand.vmem [shape: bf16[4,16], index: 7, kind: input, shape index: {}]
  %s8 = inlined_call_operand.vmem [shape: f32[1,16], index: 8, kind: input, shape index: {}]
  %s9 = inlined_call_operand.hbm [shape: f32[2,64,16], index: 9, kind: output, shape index: {}]
  %s10 = sld [smem:[#allocation0]]
  $region69: #{bottleneck_forward.1} parent=0
    _
  %s12 = ssub.s32 1, %s10
  %s13 = scalar_select 0, %s12, %s10
  $region1: #{bottleneck_forward.1} parent=0
    #allocation4 [shape = 'u8[65536]{0}', space=vmem, size = 0x10000, scoped, tag = 'output window, operand 0']
    #allocation5 [shape = 's32[2]{0}', space=sflag, size = 0x8, scoped, tag = 'scoped memory for bottleneck_forward.1']
    %14 = vsyncpa [#allocation5], 0
    %s15 = scalar_lea.sflag [#allocation5], 1
    %16 = vsyncpa %s15, 0
    loop: start=0, step=1, limit=4
    $region2: #{bottleneck_forward.1} parent=1 // loop_pre_header
      _
    $region3: #{bottleneck_forward.1} parent=1 // loop_header
      %s18 = sphi 0, %s22
      %p19 = scmp.ge.s32.totalorder %s18, 4
      %s28 = sphi 0, %s30
      %s31 = sphi 0, %s28
      %s32 = sphi 0, %s31
      %s48 = sphi 0, %s32
      %s52 = sphi 0, %s52
      %s54 = sphi 0, %s52
      %s55 = sphi 0, %s54
      %s69 = sphi 0, %s55
      %s73 = sphi 0, %s73
      %s75 = sphi 0, %s73
      %s76 = sphi 0, %s75
      %s90 = sphi 0, %s76
      %s94 = sphi 0, %s94
      %s96 = sphi 0, %s94
      %s97 = sphi 0, %s96
      %s111 = sphi 0, %s97
      %s115 = sphi 0, %s115
      %s117 = sphi 0, %s115
      %s118 = sphi 0, %s117
      %s132 = sphi 0, %s118
      %s136 = sphi 0, %s136
      %s138 = sphi 0, %s136
      %s139 = sphi 0, %s138
      %s153 = sphi 0, %s139
      %s157 = sphi 0, %s157
      %s159 = sphi 0, %s157
      %s160 = sphi 0, %s159
      %s174 = sphi 0, %s160
      %s178 = sphi 0, %s178
      %s180 = sphi 0, %s178
      %s181 = sphi 0, %s180
      %s195 = sphi 0, %s181
      %s199 = sphi 0, %s199
      %s201 = sphi 0, %s199
      %s202 = sphi 0, %s201
      %s216 = sphi 0, %s202
      %s222 = sphi 0, %s224
      %s225 = sphi 0, %s222
      %s226 = sphi 0, %s225
      %s242 = sphi 0, %s226
    $region4: #{bottleneck_forward.1} parent=1 // loop_header_branch
      %21 = sbr.rel (%p19) target = $region8
    $region5: #{bottleneck_forward.1} parent=1 // loop_body
      %s23 = ssub.s32 %s18, 1
      %s24 = ssub.s32 %s18, 2
      %s25 = sadd.s32 %s18, 1
      %s26 = ssub.s32 %s18, %s25
      %p27 = scmp.eq.s32.totalorder %s26, 0
      %s29 = sadd.s32 %s28, 1
      %s30 = scalar_select %p27, %s28, %s29
      %p33 = pneg %p27
      %p34 = scmp.eq.s32.totalorder %s18, 1
      %p35 = por %p33, %p34
      %p36 = scmp.ne.s32.totalorder %s28, %s31
      %p37 = scmp.eq.s32.totalorder %s18, 0
      %p38 = por %p36, %p37
      %p39 = scmp.ne.s32.totalorder %s28, %s31
      %p40 = scmp.eq.s32.totalorder %s23, 1
      %p41 = por %p39, %p40
      %p42 = scmp.ne.s32.totalorder %s31, %s32
      %p43 = scmp.eq.s32.totalorder %s23, 0
      %p44 = por %p42, %p43
      %p45 = scmp.ne.s32.totalorder %s31, %s32
      %p46 = scmp.eq.s32.totalorder %s24, 1
      %p47 = por %p45, %p46
      %p49 = scmp.ne.s32.totalorder %s32, %s48
      %p50 = scmp.eq.s32.totalorder %s24, 0
      %p51 = por %p49, %p50
      %s53 = sadd.s32 %s52, 1
      %p56 = scmp.eq.s32.totalorder %s18, 1
      %p57 = scmp.ne.s32.totalorder %s52, %s54
      %p58 = scmp.eq.s32.totalorder %s18, 0
      %p59 = por %p57, %p58
      %p60 = scmp.ne.s32.totalorder %s52, %s54
      %p61 = scmp.eq.s32.totalorder %s23, 1
      %p62 = por %p60, %p61
      %p63 = scmp.ne.s32.totalorder %s54, %s55
      %p64 = scmp.eq.s32.totalorder %s23, 0
      %p65 = por %p63, %p64
      %p66 = scmp.ne.s32.totalorder %s54, %s55
      %p67 = scmp.eq.s32.totalorder %s24, 1
      %p68 = por %p66, %p67
      %p70 = scmp.ne.s32.totalorder %s55, %s69
      %p71 = scmp.eq.s32.totalorder %s24, 0
      %p72 = por %p70, %p71
      %s74 = sadd.s32 %s73, 1
      %p77 = scmp.eq.s32.totalorder %s18, 1
      %p78 = scmp.ne.s32.totalorder %s73, %s75
      %p79 = scmp.eq.s32.totalorder %s18, 0
      %p80 = por %p78, %p79
      %p81 = scmp.ne.s32.totalorder %s73, %s75
      %p82 = scmp.eq.s32.totalorder %s23, 1
      %p83 = por %p81, %p82
      %p84 = scmp.ne.s32.totalorder %s75, %s76
      %p85 = scmp.eq.s32.totalorder %s23, 0
      %p86 = por %p84, %p85
      %p87 = scmp.ne.s32.totalorder %s75, %s76
      %p88 = scmp.eq.s32.totalorder %s24, 1
      %p89 = por %p87, %p88
      %p91 = scmp.ne.s32.totalorder %s76, %s90
      %p92 = scmp.eq.s32.totalorder %s24, 0
      %p93 = por %p91, %p92
      %s95 = sadd.s32 %s94, 1
      %p98 = scmp.eq.s32.totalorder %s18, 1
      %p99 = scmp.ne.s32.totalorder %s94, %s96
      %p100 = scmp.eq.s32.totalorder %s18, 0
      %p101 = por %p99, %p100
      %p102 = scmp.ne.s32.totalorder %s94, %s96
      %p103 = scmp.eq.s32.totalorder %s23, 1
      %p104 = por %p102, %p103
      %p105 = scmp.ne.s32.totalorder %s96, %s97
      %p106 = scmp.eq.s32.totalorder %s23, 0
      %p107 = por %p105, %p106
      %p108 = scmp.ne.s32.totalorder %s96, %s97
      %p109 = scmp.eq.s32.totalorder %s24, 1
      %p110 = por %p108, %p109
      %p112 = scmp.ne.s32.totalorder %s97, %s111
      %p113 = scmp.eq.s32.totalorder %s24, 0
      %p114 = por %p112, %p113
      %s116 = sadd.s32 %s115, 1
      %p119 = scmp.eq.s32.totalorder %s18, 1
      %p120 = scmp.ne.s32.totalorder %s115, %s117
      %p121 = scmp.eq.s32.totalorder %s18, 0
      %p122 = por %p120, %p121
      %p123 = scmp.ne.s32.totalorder %s115, %s117
      %p124 = scmp.eq.s32.totalorder %s23, 1
      %p125 = por %p123, %p124
      %p126 = scmp.ne.s32.totalorder %s117, %s118
      %p127 = scmp.eq.s32.totalorder %s23, 0
      %p128 = por %p126, %p127
      %p129 = scmp.ne.s32.totalorder %s117, %s118
      %p130 = scmp.eq.s32.totalorder %s24, 1
      %p131 = por %p129, %p130
      %p133 = scmp.ne.s32.totalorder %s118, %s132
      %p134 = scmp.eq.s32.totalorder %s24, 0
      %p135 = por %p133, %p134
      %s137 = sadd.s32 %s136, 1
      %p140 = scmp.eq.s32.totalorder %s18, 1
      %p141 = scmp.ne.s32.totalorder %s136, %s138
      %p142 = scmp.eq.s32.totalorder %s18, 0
      %p143 = por %p141, %p142
      %p144 = scmp.ne.s32.totalorder %s136, %s138
      %p145 = scmp.eq.s32.totalorder %s23, 1
      %p146 = por %p144, %p145
      %p147 = scmp.ne.s32.totalorder %s138, %s139
      %p148 = scmp.eq.s32.totalorder %s23, 0
      %p149 = por %p147, %p148
      %p150 = scmp.ne.s32.totalorder %s138, %s139
      %p151 = scmp.eq.s32.totalorder %s24, 1
      %p152 = por %p150, %p151
      %p154 = scmp.ne.s32.totalorder %s139, %s153
      %p155 = scmp.eq.s32.totalorder %s24, 0
      %p156 = por %p154, %p155
      %s158 = sadd.s32 %s157, 1
      %p161 = scmp.eq.s32.totalorder %s18, 1
      %p162 = scmp.ne.s32.totalorder %s157, %s159
      %p163 = scmp.eq.s32.totalorder %s18, 0
      %p164 = por %p162, %p163
      %p165 = scmp.ne.s32.totalorder %s157, %s159
      %p166 = scmp.eq.s32.totalorder %s23, 1
      %p167 = por %p165, %p166
      %p168 = scmp.ne.s32.totalorder %s159, %s160
      %p169 = scmp.eq.s32.totalorder %s23, 0
      %p170 = por %p168, %p169
      %p171 = scmp.ne.s32.totalorder %s159, %s160
      %p172 = scmp.eq.s32.totalorder %s24, 1
      %p173 = por %p171, %p172
      %p175 = scmp.ne.s32.totalorder %s160, %s174
      %p176 = scmp.eq.s32.totalorder %s24, 0
      %p177 = por %p175, %p176
      %s179 = sadd.s32 %s178, 1
      %p182 = scmp.eq.s32.totalorder %s18, 1
      %p183 = scmp.ne.s32.totalorder %s178, %s180
      %p184 = scmp.eq.s32.totalorder %s18, 0
      %p185 = por %p183, %p184
      %p186 = scmp.ne.s32.totalorder %s178, %s180
      %p187 = scmp.eq.s32.totalorder %s23, 1
      %p188 = por %p186, %p187
      %p189 = scmp.ne.s32.totalorder %s180, %s181
      %p190 = scmp.eq.s32.totalorder %s23, 0
      %p191 = por %p189, %p190
      %p192 = scmp.ne.s32.totalorder %s180, %s181
      %p193 = scmp.eq.s32.totalorder %s24, 1
      %p194 = por %p192, %p193
      %p196 = scmp.ne.s32.totalorder %s181, %s195
      %p197 = scmp.eq.s32.totalorder %s24, 0
      %p198 = por %p196, %p197
      %s200 = sadd.s32 %s199, 1
      %p203 = scmp.eq.s32.totalorder %s18, 1
      %p204 = scmp.ne.s32.totalorder %s199, %s201
      %p205 = scmp.eq.s32.totalorder %s18, 0
      %p206 = por %p204, %p205
      %p207 = scmp.ne.s32.totalorder %s199, %s201
      %p208 = scmp.eq.s32.totalorder %s23, 1
      %p209 = por %p207, %p208
      %p210 = scmp.ne.s32.totalorder %s201, %s202
      %p211 = scmp.eq.s32.totalorder %s23, 0
      %p212 = por %p210, %p211
      %p213 = scmp.ne.s32.totalorder %s201, %s202
      %p214 = scmp.eq.s32.totalorder %s24, 1
      %p215 = por %p213, %p214
      %p217 = scmp.ne.s32.totalorder %s202, %s216
      %p218 = scmp.eq.s32.totalorder %s24, 0
      %p219 = por %p217, %p218
      %s220 = ssub.s32 %s18, %s25
      %p221 = scmp.eq.s32.totalorder %s220, 0
      %s223 = sadd.s32 %s222, 1
      %s224 = scalar_select %p221, %s222, %s223
      %p227 = pneg %p221
      %p228 = scmp.eq.s32.totalorder %s18, 1
      %p229 = por %p227, %p228
      %p230 = scmp.ne.s32.totalorder %s222, %s225
      %p231 = scmp.eq.s32.totalorder %s18, 0
      %p232 = por %p230, %p231
      %p233 = scmp.ne.s32.totalorder %s222, %s225
      %p234 = scmp.eq.s32.totalorder %s23, 1
      %p235 = por %p233, %p234
      %p236 = scmp.ne.s32.totalorder %s225, %s226
      %p237 = scmp.eq.s32.totalorder %s23, 0
      %p238 = por %p236, %p237
      %p239 = scmp.ne.s32.totalorder %s225, %s226
      %p240 = scmp.eq.s32.totalorder %s24, 1
      %p241 = por %p239, %p240
      %p243 = scmp.ne.s32.totalorder %s226, %s242
      %p244 = scmp.eq.s32.totalorder %s24, 0
      %p245 = por %p243, %p244
      %p246 = scmp.le.s32.totalorder 1, %s18
      %p247 = scmp.lt.s32.totalorder %s18, 3
      %p248 = pnand %p246, %p247
      %p249 = pneg %p248
      // Predicated region
      $region9: #{bottleneck_forward.1} parent=5 // pred_check
        _
      $region10: #{bottleneck_forward.1} parent=5 // pred_check_branch
        %251 = sbr.rel (%p248) target = $region12
      $region11: #{bottleneck_forward.1} parent=5 // pred_region
        %s252 = ssub.s32 %s18, 1
        // Predicated region
        $region13: #{bottleneck_forward.1} parent=11 // pred_check
          %p253 = pneg %p65
        $region14: #{bottleneck_forward.1} parent=11 // pred_check_branch
          %255 = sbr.rel (%p253) target = $region16
        $region15: #{bottleneck_forward.1} parent=11 // pred_region
          _
        $region16: #{bottleneck_forward.1} parent=11 // pred_fallthru
          _
        // Predicated region
        $region17: #{bottleneck_forward.1} parent=11 // pred_check
          %p256 = pneg %p86
        $region18: #{bottleneck_forward.1} parent=11 // pred_check_branch
          %258 = sbr.rel (%p256) target = $region20
        $region19: #{bottleneck_forward.1} parent=11 // pred_region
          _
        $region20: #{bottleneck_forward.1} parent=11 // pred_fallthru
          _
        // Predicated region
        $region21: #{bottleneck_forward.1} parent=11 // pred_check
          %p259 = pneg %p107
        $region22: #{bottleneck_forward.1} parent=11 // pred_check_branch
          %261 = sbr.rel (%p259) target = $region24
        $region23: #{bottleneck_forward.1} parent=11 // pred_region
          _
        $region24: #{bottleneck_forward.1} parent=11 // pred_fallthru
          _
        // Predicated region
        $region25: #{bottleneck_forward.1} parent=11 // pred_check
          %p262 = pneg %p128
        $region26: #{bottleneck_forward.1} parent=11 // pred_check_branch
          %264 = sbr.rel (%p262) target = $region28
        $region27: #{bottleneck_forward.1} parent=11 // pred_region
          _
        $region28: #{bottleneck_forward.1} parent=11 // pred_fallthru
          _
        // Predicated region
        $region29: #{bottleneck_forward.1} parent=11 // pred_check
          %p265 = pneg %p149
        $region30: #{bottleneck_forward.1} parent=11 // pred_check_branch
          %267 = sbr.rel (%p265) target = $region32
        $region31: #{bottleneck_forward.1} parent=11 // pred_region
          _
        $region32: #{bottleneck_forward.1} parent=11 // pred_fallthru
          _
        // Predicated region
        $region33: #{bottleneck_forward.1} parent=11 // pred_check
          %p268 = pneg %p170
        $region34: #{bottleneck_forward.1} parent=11 // pred_check_branch
          %270 = sbr.rel (%p268) target = $region36
        $region35: #{bottleneck_forward.1} parent=11 // pred_region
          _
        $region36: #{bottleneck_forward.1} parent=11 // pred_fallthru
          _
        // Predicated region
        $region37: #{bottleneck_forward.1} parent=11 // pred_check
          %p271 = pneg %p191
        $region38: #{bottleneck_forward.1} parent=11 // pred_check_branch
          %273 = sbr.rel (%p271) target = $region40
        $region39: #{bottleneck_forward.1} parent=11 // pred_region
          _
        $region40: #{bottleneck_forward.1} parent=11 // pred_fallthru
          _
        // Predicated region
        $region41: #{bottleneck_forward.1} parent=11 // pred_check
          %p274 = pneg %p212
        $region42: #{bottleneck_forward.1} parent=11 // pred_check_branch
          %276 = sbr.rel (%p274) target = $region44
        $region43: #{bottleneck_forward.1} parent=11 // pred_region
          _
        $region44: #{bottleneck_forward.1} parent=11 // pred_fallthru
          _
      $region12: #{bottleneck_forward.1} parent=5 // pred_fallthru
        _
      %p277 = scmp.lt.s32.totalorder %s18, 2
      // Predicated region
      $region45: #{bottleneck_forward.1} parent=5 // pred_check
        %p278 = pneg %p277
      $region46: #{bottleneck_forward.1} parent=5 // pred_check_branch
        %280 = sbr.rel (%p278) target = $region48
      $region47: #{bottleneck_forward.1} parent=5 // pred_region
        // Predicated region
        $region49: #{bottleneck_forward.1} parent=47 // pred_check
          %p281 = pneg %p38
        $region50: #{bottleneck_forward.1} parent=47 // pred_check_branch
          %283 = sbr.rel (%p281) target = $region52
        $region51: #{bottleneck_forward.1} parent=47 // pred_region
          %p284 = scmp.lt.s32.totalorder %s18, 1
          %s285 = scalar_select %p284, %s18, 1
          %s286 = smul.addr %s285, 32
          %s287 = smul.addr %s286, 4
          %s288 = scalar_lea.vmem %s0, %s287
        $region52: #{bottleneck_forward.1} parent=47 // pred_fallthru
          _
      $region48: #{bottleneck_forward.1} parent=5 // pred_fallthru
        _
      %p289 = scmp.le.s32.totalorder 1, %s18
      %p290 = scmp.lt.s32.totalorder %s18, 3
      %p291 = pnand %p289, %p290
      %p292 = pneg %p291
      // Predicated region
      $region53: #{bottleneck_forward.1} parent=5 // pred_check
        _
      $region54: #{bottleneck_forward.1} parent=5 // pred_check_branch
        %294 = sbr.rel (%p291) target = $region56
      $region55: #{bottleneck_forward.1} parent=5 // pred_region
        %s295 = ssub.s32 %s18, 1
        %p296 = scmp.lt.s32.totalorder %s23, 1
        %s297 = scalar_select %p296, %s23, 1
        %s298 = smul.addr %s297, 32
        %s299 = smul.addr %s298, 4
        %s300 = scalar_lea.vmem %s0, %s299
        %p301 = pneg %p44
        %p302 = pneg %p41
        %p303 = pneg %p65
        %p304 = pneg %p62
        %p305 = pneg %p86
        %p306 = pneg %p83
        %p307 = pneg %p107
        %p308 = pneg %p104
        %p309 = pneg %p128
        %p310 = pneg %p125
        %p311 = pneg %p149
        %p312 = pneg %p146
        %p313 = pneg %p170
        %p314 = pneg %p167
        %p315 = pneg %p191
        %p316 = pneg %p188
        %p317 = pneg %p212
        %p318 = pneg %p209
        %p319 = pneg %p238
        %p320 = pneg %p235
        %s321 = sand.u32 %s225, 1
        %s322 = scalar_lea.sflag [#allocation5], %s321
        %s323 = sand.u32 %s225, 1
        %s324 = smul.addr %s323, 64
        %s325 = scalar_lea.vmem [#allocation4], %s324
        %p326 = scmp.lt.s32.totalorder %s23, 1
        %s327 = scalar_select %p326, %s23, 1
        %s328 = smul.addr %s327, 32
        %s329 = smul.addr %s328, 4
        %s330 = scalar_lea.vmem %s0, %s329
        %v332 = vld [vmem:[%s330] sm:$0xf]
        %v333 = vld [vmem:[%s330 + $0x4] sm:$0xf]
        %v334 = vld [vmem:[%s330 + $0x8] sm:$0xf]
        %v335 = vld [vmem:[%s330 + $0xc] sm:$0xf]
        %v336 = vld [vmem:[%s330 + $0x10] sm:$0xf]
        %v337 = vld [vmem:[%s330 + $0x14] sm:$0xf]
        %v338 = vld [vmem:[%s330 + $0x18] sm:$0xf]
        %v339 = vld [vmem:[%s330 + $0x1c] sm:$0xf]
        %v340 = vld [vmem:[%s330 + $0x20] sm:$0xf]
        %v341 = vld [vmem:[%s330 + $0x24] sm:$0xf]
        %v342 = vld [vmem:[%s330 + $0x28] sm:$0xf]
        %v343 = vld [vmem:[%s330 + $0x2c] sm:$0xf]
        %v344 = vld [vmem:[%s330 + $0x30] sm:$0xf]
        %v345 = vld [vmem:[%s330 + $0x34] sm:$0xf]
        %v346 = vld [vmem:[%s330 + $0x38] sm:$0xf]
        %v347 = vld [vmem:[%s330 + $0x3c] sm:$0xf]
        %v348 = vld [vmem:[%s330 + $0x40] sm:$0xf]
        %v349 = vld [vmem:[%s330 + $0x44] sm:$0xf]
        %v350 = vld [vmem:[%s330 + $0x48] sm:$0xf]
        %v351 = vld [vmem:[%s330 + $0x4c] sm:$0xf]
        %v352 = vld [vmem:[%s330 + $0x50] sm:$0xf]
        %v353 = vld [vmem:[%s330 + $0x54] sm:$0xf]
        %v354 = vld [vmem:[%s330 + $0x58] sm:$0xf]
        %v355 = vld [vmem:[%s330 + $0x5c] sm:$0xf]
        %v356 = vld [vmem:[%s330 + $0x60] sm:$0xf]
        %v357 = vld [vmem:[%s330 + $0x64] sm:$0xf]
        %v358 = vld [vmem:[%s330 + $0x68] sm:$0xf]
        %v359 = vld [vmem:[%s330 + $0x6c] sm:$0xf]
        %v360 = vld [vmem:[%s330 + $0x70] sm:$0xf]
        %v361 = vld [vmem:[%s330 + $0x74] sm:$0xf]
        %v362 = vld [vmem:[%s330 + $0x78] sm:$0xf]
        %v363 = vld [vmem:[%s330 + $0x7c] sm:$0xf]
        %v364 = vld [vmem:[%s1] sm:$0x3]
        %v365 = vld [vmem:[%s2] sm:$0x1]
        %v367 = vlaneseq
        %v368 = vshrl.u32 %v367, 7
        %v369 = vsub.s32 0, %v368
        %v370 = vrot.slane %v365, %v369
        %v404 = vunpack.c.l.b16 %v332
        %v405 = vunpack.c.l.b16 %v333
        %v406 = vunpack.c.l.b16 %v334
        %v407 = vunpack.c.l.b16 %v335
        %v408 = vunpack.c.l.b16 %v336
        %v409 = vunpack.c.l.b16 %v337
        %v410 = vunpack.c.l.b16 %v338
        %v411 = vunpack.c.l.b16 %v339
        %v412 = vunpack.c.l.b16 %v340
        %v413 = vunpack.c.l.b16 %v341
        %v414 = vunpack.c.l.b16 %v342
        %v415 = vunpack.c.l.b16 %v343
        %v416 = vunpack.c.l.b16 %v344
        %v417 = vunpack.c.l.b16 %v345
        %v418 = vunpack.c.l.b16 %v346
        %v419 = vunpack.c.l.b16 %v347
        %v420 = vunpack.c.l.b16 %v348
        %v421 = vunpack.c.l.b16 %v349
        %v422 = vunpack.c.l.b16 %v350
        %v423 = vunpack.c.l.b16 %v351
        %v424 = vunpack.c.l.b16 %v352
        %v425 = vunpack.c.l.b16 %v353
        %v426 = vunpack.c.l.b16 %v354
        %v427 = vunpack.c.l.b16 %v355
        %v428 = vunpack.c.l.b16 %v356
        %v429 = vunpack.c.l.b16 %v357
        %v430 = vunpack.c.l.b16 %v358
        %v431 = vunpack.c.l.b16 %v359
        %v432 = vunpack.c.l.b16 %v360
        %v433 = vunpack.c.l.b16 %v361
        %v434 = vunpack.c.l.b16 %v362
        %v435 = vunpack.c.l.b16 %v363
        %v436 = vpack.c.b16 %v405, %v404
        %v437 = vpack.c.b16 %v407, %v406
        %v438 = vpack.c.b16 %v409, %v408
        %v439 = vpack.c.b16 %v411, %v410
        %v440 = vpack.c.b16 %v413, %v412
        %v441 = vpack.c.b16 %v415, %v414
        %v442 = vpack.c.b16 %v417, %v416
        %v443 = vpack.c.b16 %v419, %v418
        %v444 = vpack.c.b16 %v421, %v420
        %v445 = vpack.c.b16 %v423, %v422
        %v446 = vpack.c.b16 %v425, %v424
        %v447 = vpack.c.b16 %v427, %v426
        %v448 = vpack.c.b16 %v429, %v428
        %v449 = vpack.c.b16 %v431, %v430
        %v450 = vpack.c.b16 %v433, %v432
        %v451 = vpack.c.b16 %v435, %v434
        %vm452 = vcmask 31744
        %v454 = vsel %vm452, %v436, 0
        %v457 = vsel %vm452, %v437, 0
        %v460 = vsel %vm452, %v438, 0
        %v463 = vsel %vm452, %v439, 0
        %v466 = vsel %vm452, %v440, 0
        %v469 = vsel %vm452, %v441, 0
        %v472 = vsel %vm452, %v442, 0
        %v475 = vsel %vm452, %v443, 0
        %v478 = vsel %vm452, %v444, 0
        %v481 = vsel %vm452, %v445, 0
        %v484 = vsel %vm452, %v446, 0
        %v487 = vsel %vm452, %v447, 0
        %v490 = vsel %vm452, %v448, 0
        %v493 = vsel %vm452, %v449, 0
        %v496 = vsel %vm452, %v450, 0
        %v499 = vsel %vm452, %v451, 0
        %vm501 = vcmask 1041408
        %v503 = vsel %vm501, %v364, 0
        %505 = vmatprep.subr.bf16.mxu0 0
        %506 = vmatpush1.bf16.msra.mxu0 %v503
        %507 = vmatprep.subr.bf16.mxu0 0
        %508 = vmatpush1.bf16.msra.mxu0 0
        %509 = vmatprep.subr.bf16.mxu0 0
        %510 = vmatpush1.bf16.msra.mxu0 0
        %511 = vmatprep.subr.bf16.mxu0 0
        %512 = vmatpush1.bf16.msra.mxu0 0
        %513 = vmatprep.subr.bf16.mxu0 0
        %514 = vmatpush1.bf16.msra.mxu0 0
        %515 = vmatprep.subr.bf16.mxu0 0
        %516 = vmatpush1.bf16.msra.mxu0 0
        %517 = vmatprep.subr.bf16.mxu0 0
        %518 = vmatpush1.bf16.msra.mxu0 0
        %519 = vmatprep.subr.bf16.mxu0 0
        %520 = vmatpush1.bf16.msra.mxu0 0
        %521 = vmatprep.subr.bf16.mxu0 0
        %522 = vmatpush1.bf16.msra.mxu0 0
        %523 = vmatprep.subr.bf16.mxu0 0
        %524 = vmatpush1.bf16.msra.mxu0 0
        %525 = vmatprep.subr.bf16.mxu0 0
        %526 = vmatpush1.bf16.msra.mxu0 0
        %527 = vmatprep.subr.bf16.mxu0 0
        %528 = vmatpush1.bf16.msra.mxu0 0
        %529 = vmatprep.subr.bf16.mxu0 0
        %530 = vmatpush1.bf16.msra.mxu0 0
        %531 = vmatprep.subr.bf16.mxu0 0
        %532 = vmatpush1.bf16.msra.mxu0 0
        %533 = vmatprep.subr.bf16.mxu0 0
        %534 = vmatpush1.bf16.msra.mxu0 0
        %535 = vmatprep.subr.bf16.mxu0 0
        %536 = vmatpush1.bf16.msra.mxu0 0
        %537 = vmatprep.mubr.bf16.mxu0 0
        %538 = vmatmul.mubr.bf16.gmra.mrb[0].mxu0 %v454
        %v539 = vpop.f32.mrb[0].mxu0
        %v540 = vadd.f32 %v370, %v539
        %v541 = vpop.f32.mrb[0].mxu0
        %v542 = vpop.f32.mrb[0].mxu0
        %v543 = vadd.f32 %v370, %v542
        %v544 = vpop.f32.mrb[0].mxu0
        %545 = vmatprep.mubr.bf16.mxu0 0
        %546 = vmatmul.mubr.bf16.gmra.mrb[0].mxu0 %v457
        %v547 = vpop.f32.mrb[0].mxu0
        %v548 = vadd.f32 %v370, %v547
        %v549 = vpop.f32.mrb[0].mxu0
        %v550 = vpop.f32.mrb[0].mxu0
        %v551 = vadd.f32 %v370, %v550
        %v552 = vpop.f32.mrb[0].mxu0
        %553 = vmatprep.mubr.bf16.mxu0 0
        %554 = vmatmul.mubr.bf16.gmra.mrb[0].mxu0 %v460
        %v555 = vpop.f32.mrb[0].mxu0
        %v556 = vadd.f32 %v370, %v555
        %v557 = vpop.f32.mrb[0].mxu0
        %v558 = vpop.f32.mrb[0].mxu0
        %v559 = vadd.f32 %v370, %v558
        %v560 = vpop.f32.mrb[0].mxu0
        %561 = vmatprep.mubr.bf16.mxu0 0
        %562 = vmatmul.mubr.bf16.gmra.mrb[0].mxu0 %v463
        %v563 = vpop.f32.mrb[0].mxu0
        %v564 = vadd.f32 %v370, %v563
        %v565 = vpop.f32.mrb[0].mxu0
        %v566 = vpop.f32.mrb[0].mxu0
        %v567 = vadd.f32 %v370, %v566
        %v568 = vpop.f32.mrb[0].mxu0
        %569 = vmatprep.mubr.bf16.mxu0 0
        %570 = vmatmul.mubr.bf16.gmra.mrb[0].mxu0 %v466
        %v571 = vpop.f32.mrb[0].mxu0
        %v572 = vadd.f32 %v370, %v571
        %v573 = vpop.f32.mrb[0].mxu0
        %v574 = vpop.f32.mrb[0].mxu0
        %v575 = vadd.f32 %v370, %v574
        %v576 = vpop.f32.mrb[0].mxu0
        %577 = vmatprep.mubr.bf16.mxu0 0
        %578 = vmatmul.mubr.bf16.gmra.mrb[0].mxu0 %v469
        %v579 = vpop.f32.mrb[0].mxu0
        %v580 = vadd.f32 %v370, %v579
        %v581 = vpop.f32.mrb[0].mxu0
        %v582 = vpop.f32.mrb[0].mxu0
        %v583 = vadd.f32 %v370, %v582
        %v584 = vpop.f32.mrb[0].mxu0
        %585 = vmatprep.mubr.bf16.mxu0 0
        %586 = vmatmul.mubr.bf16.gmra.mrb[0].mxu0 %v472
        %v587 = vpop.f32.mrb[0].mxu0
        %v588 = vadd.f32 %v370, %v587
        %v589 = vpop.f32.mrb[0].mxu0
        %v590 = vpop.f32.mrb[0].mxu0
        %v591 = vadd.f32 %v370, %v590
        %v592 = vpop.f32.mrb[0].mxu0
        %593 = vmatprep.mubr.bf16.mxu0 0
        %594 = vmatmul.mubr.bf16.gmra.mrb[0].mxu0 %v475
        %v595 = vpop.f32.mrb[0].mxu0
        %v596 = vadd.f32 %v370, %v595
        %v597 = vpop.f32.mrb[0].mxu0
        %v598 = vpop.f32.mrb[0].mxu0
        %v599 = vadd.f32 %v370, %v598
        %v600 = vpop.f32.mrb[0].mxu0
        %601 = vmatprep.mubr.bf16.mxu0 0
        %602 = vmatmul.mubr.bf16.gmra.mrb[0].mxu0 %v478
        %v603 = vpop.f32.mrb[0].mxu0
        %v604 = vadd.f32 %v370, %v603
        %v605 = vpop.f32.mrb[0].mxu0
        %v606 = vpop.f32.mrb[0].mxu0
        %v607 = vadd.f32 %v370, %v606
        %v608 = vpop.f32.mrb[0].mxu0
        %609 = vmatprep.mubr.bf16.mxu0 0
        %610 = vmatmul.mubr.bf16.gmra.mrb[0].mxu0 %v481
        %v611 = vpop.f32.mrb[0].mxu0
        %v612 = vadd.f32 %v370, %v611
        %v613 = vpop.f32.mrb[0].mxu0
        %v614 = vpop.f32.mrb[0].mxu0
        %v615 = vadd.f32 %v370, %v614
        %v616 = vpop.f32.mrb[0].mxu0
        %617 = vmatprep.mubr.bf16.mxu0 0
        %618 = vmatmul.mubr.bf16.gmra.mrb[0].mxu0 %v484
        %v619 = vpop.f32.mrb[0].mxu0
        %v620 = vadd.f32 %v370, %v619
        %v621 = vpop.f32.mrb[0].mxu0
        %v622 = vpop.f32.mrb[0].mxu0
        %v623 = vadd.f32 %v370, %v622
        %v624 = vpop.f32.mrb[0].mxu0
        %625 = vmatprep.mubr.bf16.mxu0 0
        %626 = vmatmul.mubr.bf16.gmra.mrb[0].mxu0 %v487
        %v627 = vpop.f32.mrb[0].mxu0
        %v628 = vadd.f32 %v370, %v627
        %v629 = vpop.f32.mrb[0].mxu0
        %v630 = vpop.f32.mrb[0].mxu0
        %v631 = vadd.f32 %v370, %v630
        %v632 = vpop.f32.mrb[0].mxu0
        %633 = vmatprep.mubr.bf16.mxu0 0
        %634 = vmatmul.mubr.bf16.gmra.mrb[0].mxu0 %v490
        %v635 = vpop.f32.mrb[0].mxu0
        %v636 = vadd.f32 %v370, %v635
        %v637 = vpop.f32.mrb[0].mxu0
        %v638 = vpop.f32.mrb[0].mxu0
        %v639 = vadd.f32 %v370, %v638
        %v640 = vpop.f32.mrb[0].mxu0
        %641 = vmatprep.mubr.bf16.mxu0 0
        %642 = vmatmul.mubr.bf16.gmra.mrb[0].mxu0 %v493
        %v643 = vpop.f32.mrb[0].mxu0
        %v644 = vadd.f32 %v370, %v643
        %v645 = vpop.f32.mrb[0].mxu0
        %v646 = vpop.f32.mrb[0].mxu0
        %v647 = vadd.f32 %v370, %v646
        %v648 = vpop.f32.mrb[0].mxu0
        %649 = vmatprep.mubr.bf16.mxu0 0
        %650 = vmatmul.mubr.bf16.gmra.mrb[0].mxu0 %v496
        %v651 = vpop.f32.mrb[0].mxu0
        %v652 = vadd.f32 %v370, %v651
        %v653 = vpop.f32.mrb[0].mxu0
        %v654 = vpop.f32.mrb[0].mxu0
        %v655 = vadd.f32 %v370, %v654
        %v656 = vpop.f32.mrb[0].mxu0
        %657 = vmatprep.mubr.bf16.mxu0 0
        %658 = vmatmul.mubr.bf16.gmra.mrb[0].mxu0 %v499
        %v659 = vpop.f32.mrb[0].mxu0
        %v660 = vadd.f32 %v370, %v659
        %v661 = vpop.f32.mrb[0].mxu0
        %v662 = vpop.f32.mrb[0].mxu0
        %v663 = vadd.f32 %v370, %v662
        %v664 = vpop.f32.mrb[0].mxu0
        %665 = vdwg.mxu0
        %v666 = vmax.f32 %v540, 0.0
        %v667 = vmax.f32 %v543, 0.0
        %v668 = vmax.f32 %v548, 0.0
        %v669 = vmax.f32 %v551, 0.0
        %v670 = vmax.f32 %v556, 0.0
        %v671 = vmax.f32 %v559, 0.0
        %v672 = vmax.f32 %v564, 0.0
        %v673 = vmax.f32 %v567, 0.0
        %v674 = vmax.f32 %v572, 0.0
        %v675 = vmax.f32 %v575, 0.0
        %v676 = vmax.f32 %v580, 0.0
        %v677 = vmax.f32 %v583, 0.0
        %v678 = vmax.f32 %v588, 0.0
        %v679 = vmax.f32 %v591, 0.0
        %v680 = vmax.f32 %v596, 0.0
        %v681 = vmax.f32 %v599, 0.0
        %v682 = vmax.f32 %v604, 0.0
        %v683 = vmax.f32 %v607, 0.0
        %v684 = vmax.f32 %v612, 0.0
        %v685 = vmax.f32 %v615, 0.0
        %v686 = vmax.f32 %v620, 0.0
        %v687 = vmax.f32 %v623, 0.0
        %v688 = vmax.f32 %v628, 0.0
        %v689 = vmax.f32 %v631, 0.0
        %v690 = vmax.f32 %v636, 0.0
        %v691 = vmax.f32 %v639, 0.0
        %v692 = vmax.f32 %v644, 0.0
        %v693 = vmax.f32 %v647, 0.0
        %v694 = vmax.f32 %v652, 0.0
        %v695 = vmax.f32 %v655, 0.0
        %v696 = vmax.f32 %v660, 0.0
        %v697 = vmax.f32 %v663, 0.0
        %vm730 = vcmask 1040384
        %v731 = vrot.slane %v666, 7
        %v732 = vrot.slane %v667, 7
        %v733 = vsel %vm730, %v731, %v732
        %v734 = vrot.slane %v668, 7
        %v735 = vrot.slane %v669, 7
        %v736 = vsel %vm730, %v734, %v735
        %v737 = vrot.slane %v670, 7
        %v738 = vrot.slane %v671, 7
        %v739 = vsel %vm730, %v737, %v738
        %v740 = vrot.slane %v672, 7
        %v741 = vrot.slane %v673, 7
        %v742 = vsel %vm730, %v740, %v741
        %v743 = vrot.slane %v674, 7
        %v744 = vrot.slane %v675, 7
        %v745 = vsel %vm730, %v743, %v744
        %v746 = vrot.slane %v676, 7
        %v747 = vrot.slane %v677, 7
        %v748 = vsel %vm730, %v746, %v747
        %v749 = vrot.slane %v678, 7
        %v750 = vrot.slane %v679, 7
        %v751 = vsel %vm730, %v749, %v750
        %v752 = vrot.slane %v680, 7
        %v753 = vrot.slane %v681, 7
        %v754 = vsel %vm730, %v752, %v753
        %v755 = vrot.slane %v682, 7
        %v756 = vrot.slane %v683, 7
        %v757 = vsel %vm730, %v755, %v756
        %v758 = vrot.slane %v684, 7
        %v759 = vrot.slane %v685, 7
        %v760 = vsel %vm730, %v758, %v759
        %v761 = vrot.slane %v686, 7
        %v762 = vrot.slane %v687, 7
        %v763 = vsel %vm730, %v761, %v762
        %v764 = vrot.slane %v688, 7
        %v765 = vrot.slane %v689, 7
        %v766 = vsel %vm730, %v764, %v765
        %v767 = vrot.slane %v690, 7
        %v768 = vrot.slane %v691, 7
        %v769 = vsel %vm730, %v767, %v768
        %v770 = vrot.slane %v692, 7
        %v771 = vrot.slane %v693, 7
        %v772 = vsel %vm730, %v770, %v771
        %v773 = vrot.slane %v694, 7
        %v774 = vrot.slane %v695, 7
        %v775 = vsel %vm730, %v773, %v774
        %v776 = vrot.slane %v696, 7
        %v777 = vrot.slane %v697, 7
        %v778 = vsel %vm730, %v776, %v777
        %v827 = vsel %vm730, 0.0, %v731
        %v828 = vsel %vm730, 0.0, %v734
        %v829 = vsel %vm730, 0.0, %v737
        %v830 = vsel %vm730, 0.0, %v740
        %v831 = vsel %vm730, 0.0, %v743
        %v832 = vsel %vm730, 0.0, %v746
        %v833 = vsel %vm730, 0.0, %v749
        %v834 = vsel %vm730, 0.0, %v752
        %v835 = vsel %vm730, 0.0, %v755
        %v836 = vsel %vm730, 0.0, %v758
        %v837 = vsel %vm730, 0.0, %v761
        %v838 = vsel %vm730, 0.0, %v764
        %v839 = vsel %vm730, 0.0, %v767
        %v840 = vsel %vm730, 0.0, %v770
        %v841 = vsel %vm730, 0.0, %v773
        %v842 = vsel %vm730, 0.0, %v776
        %v843 = vsel %vm730, %v732, 0.0
        %v844 = vsel %vm730, %v735, 0.0
        %v845 = vsel %vm730, %v738, 0.0
        %v846 = vsel %vm730, %v741, 0.0
        %v847 = vsel %vm730, %v744, 0.0
        %v848 = vsel %vm730, %v747, 0.0
        %v849 = vsel %vm730, %v750, 0.0
        %v850 = vsel %vm730, %v753, 0.0
        %v851 = vsel %vm730, %v756, 0.0
        %v852 = vsel %vm730, %v759, 0.0
        %v853 = vsel %vm730, %v762, 0.0
        %v854 = vsel %vm730, %v765, 0.0
        %v855 = vsel %vm730, %v768, 0.0
        %v856 = vsel %vm730, %v771, 0.0
        %v857 = vsel %vm730, %v774, 0.0
        %v858 = vsel %vm730, %v777, 0.0
        %859 = vst.msk [vmem:[#allocation2] sm:$0xff] %vm452, 0.0
        %860 = vst.msk [vmem:[#allocation2 + $0x8] sm:$0xff] %vm452, 0.0
        %861 = vst.msk [vmem:[#allocation2 + $0x10] sm:$0xff] %vm452, 0.0
        %862 = vst.msk [vmem:[#allocation2 + $0x18] sm:$0xff] %vm452, %v827
        %863 = vst.msk [vmem:[#allocation2 + $0x20] sm:$0xff] %vm452, %v733
        %864 = vst.msk [vmem:[#allocation2 + $0x28] sm:$0xff] %vm452, %v843
        %865 = vst.msk [vmem:[#allocation2 + $0x30] sm:$0xff] %vm452, %v828
        %866 = vst.msk [vmem:[#allocation2 + $0x38] sm:$0xff] %vm452, %v736
        %867 = vst.msk [vmem:[#allocation2 + $0x40] sm:$0xff] %vm452, %v844
        %868 = vst.msk [vmem:[#allocation2 + $0x48] sm:$0xff] %vm452, %v829
        %869 = vst.msk [vmem:[#allocation2 + $0x50] sm:$0xff] %vm452, %v739
        %870 = vst.msk [vmem:[#allocation2 + $0x58] sm:$0xff] %vm452, %v845
        %871 = vst.msk [vmem:[#allocation2 + $0x60] sm:$0xff] %vm452, %v830
        %872 = vst.msk [vmem:[#allocation2 + $0x68] sm:$0xff] %vm452, %v742
        %873 = vst.msk [vmem:[#allocation2 + $0x70] sm:$0xff] %vm452, %v846
        %874 = vst.msk [vmem:[#allocation2 + $0x78] sm:$0xff] %vm452, %v831
        %875 = vst.msk [vmem:[#allocation2 + $0x80] sm:$0xff] %vm452, %v745
        %876 = vst.msk [vmem:[#allocation2 + $0x88] sm:$0xff] %vm452, %v847
        %877 = vst.msk [vmem:[#allocation2 + $0x90] sm:$0xff] %vm452, %v832
        %878 = vst.msk [vmem:[#allocation2 + $0x98] sm:$0xff] %vm452, %v748
        %879 = vst.msk [vmem:[#allocation2 + $0xa0] sm:$0xff] %vm452, %v848
        %880 = vst.msk [vmem:[#allocation2 + $0xa8] sm:$0xff] %vm452, %v833
        %881 = vst.msk [vmem:[#allocation2 + $0xb0] sm:$0xff] %vm452, %v751
        %882 = vst.msk [vmem:[#allocation2 + $0xb8] sm:$0xff] %vm452, %v849
        %883 = vst.msk [vmem:[#allocation2 + $0xc0] sm:$0xff] %vm452, %v834
        %884 = vst.msk [vmem:[#allocation2 + $0xc8] sm:$0xff] %vm452, %v754
        %885 = vst.msk [vmem:[#allocation2 + $0xd0] sm:$0xff] %vm452, %v850
        %886 = vst.msk [vmem:[#allocation2 + $0xd8] sm:$0xff] %vm452, %v835
        %887 = vst.msk [vmem:[#allocation2 + $0xe0] sm:$0xff] %vm452, %v757
        %888 = vst.msk [vmem:[#allocation2 + $0xe8] sm:$0xff] %vm452, %v851
        %889 = vst.msk [vmem:[#allocation2 + $0xf0] sm:$0xff] %vm452, %v836
        %890 = vst.msk [vmem:[#allocation2 + $0xf8] sm:$0xff] %vm452, %v760
        %891 = vst.msk [vmem:[#allocation2 + $0x100] sm:$0xff] %vm452, %v852
        %892 = vst.msk [vmem:[#allocation2 + $0x108] sm:$0xff] %vm452, %v837
        %893 = vst.msk [vmem:[#allocation2 + $0x110] sm:$0xff] %vm452, %v763
        %894 = vst.msk [vmem:[#allocation2 + $0x118] sm:$0xff] %vm452, %v853
        %895 = vst.msk [vmem:[#allocation2 + $0x120] sm:$0xff] %vm452, %v838
        %896 = vst.msk [vmem:[#allocation2 + $0x128] sm:$0xff] %vm452, %v766
        %897 = vst.msk [vmem:[#allocation2 + $0x130] sm:$0xff] %vm452, %v854
        %898 = vst.msk [vmem:[#allocation2 + $0x138] sm:$0xff] %vm452, %v839
        %899 = vst.msk [vmem:[#allocation2 + $0x140] sm:$0xff] %vm452, %v769
        %900 = vst.msk [vmem:[#allocation2 + $0x148] sm:$0xff] %vm452, %v855
        %901 = vst.msk [vmem:[#allocation2 + $0x150] sm:$0xff] %vm452, %v840
        %902 = vst.msk [vmem:[#allocation2 + $0x158] sm:$0xff] %vm452, %v772
        %903 = vst.msk [vmem:[#allocation2 + $0x160] sm:$0xff] %vm452, %v856
        %904 = vst.msk [vmem:[#allocation2 + $0x168] sm:$0xff] %vm452, %v841
        %905 = vst.msk [vmem:[#allocation2 + $0x170] sm:$0xff] %vm452, %v775
        %906 = vst.msk [vmem:[#allocation2 + $0x178] sm:$0xff] %vm452, %v857
        %907 = vst.msk [vmem:[#allocation2 + $0x180] sm:$0xff] %vm452, %v842
        %908 = vst.msk [vmem:[#allocation2 + $0x188] sm:$0xff] %vm452, %v778
        %909 = vst.msk [vmem:[#allocation2 + $0x190] sm:$0xff] %vm452, %v858
        %910 = vst.msk [vmem:[#allocation2 + $0x198] sm:$0xff] %vm452, 0.0
        %911 = vst.msk [vmem:[#allocation2 + $0x1a0] sm:$0xff] %vm452, 0.0
        %912 = vst.msk [vmem:[#allocation2 + $0x1a8] sm:$0xff] %vm452, 0.0
        %v913 = vld [vmem:[#allocation2] ss:$2 sm:$0xff]
        %s914 = scalar_lea.vmem [#allocation2], 48
        %v915 = vld [vmem:[%s914] ss:$2 sm:$0xff]
        %s916 = scalar_lea.vmem [#allocation2], 96
        %v917 = vld [vmem:[%s916] ss:$2 sm:$0xff]
        %s918 = scalar_lea.vmem [#allocation2], 144
        %v919 = vld [vmem:[%s918] ss:$2 sm:$0xff]
        %s920 = scalar_lea.vmem [#allocation2], 192
        %v921 = vld [vmem:[%s920] ss:$2 sm:$0xff]
        %s922 = scalar_lea.vmem [#allocation2], 240
        %v923 = vld [vmem:[%s922] ss:$2 sm:$0xff]
        %s924 = scalar_lea.vmem [#allocation2], 288
        %v925 = vld [vmem:[%s924] ss:$2 sm:$0xff]
        %s926 = scalar_lea.vmem [#allocation2], 336
        %v927 = vld [vmem:[%s926] ss:$2 sm:$0xff]
        %v928 = vpack.c.bf16 %v915, %v913
        %v929 = vpack.c.bf16 %v919, %v917
        %v930 = vpack.c.bf16 %v923, %v921
        %v931 = vpack.c.bf16 %v927, %v925
        %s932 = scalar_lea.vmem [#allocation2], 1
        %v933 = vld [vmem:[%s932] ss:$2 sm:$0xff]
        %s934 = scalar_lea.vmem [#allocation2], 49
        %v935 = vld [vmem:[%s934] ss:$2 sm:$0xff]
        %s936 = scalar_lea.vmem [#allocation2], 97
        %v937 = vld [vmem:[%s936] ss:$2 sm:$0xff]
        %s938 = scalar_lea.vmem [#allocation2], 145
        %v939 = vld [vmem:[%s938] ss:$2 sm:$0xff]
        %s940 = scalar_lea.vmem [#allocation2], 193
        %v941 = vld [vmem:[%s940] ss:$2 sm:$0xff]
        %s942 = scalar_lea.vmem [#allocation2], 241
        %v943 = vld [vmem:[%s942] ss:$2 sm:$0xff]
        %s944 = scalar_lea.vmem [#allocation2], 289
        %v945 = vld [vmem:[%s944] ss:$2 sm:$0xff]
        %s946 = scalar_lea.vmem [#allocation2], 337
        %v947 = vld [vmem:[%s946] ss:$2 sm:$0xff]
        %v948 = vpack.c.bf16 %v935, %v933
        %v949 = vpack.c.bf16 %v939, %v937
        %v950 = vpack.c.bf16 %v943, %v941
        %v951 = vpack.c.bf16 %v947, %v945
        %s952 = scalar_lea.vmem [#allocation2], 2
        %v953 = vld [vmem:[%s952] ss:$2 sm:$0xff]
        %s954 = scalar_lea.vmem [#allocation2], 50
        %v955 = vld [vmem:[%s954] ss:$2 sm:$0xff]
        %s956 = scalar_lea.vmem [#allocation2], 98
        %v957 = vld [vmem:[%s956] ss:$2 sm:$0xff]
        %s958 = scalar_lea.vmem [#allocation2], 146
        %v959 = vld [vmem:[%s958] ss:$2 sm:$0xff]
        %s960 = scalar_lea.vmem [#allocation2], 194
        %v961 = vld [vmem:[%s960] ss:$2 sm:$0xff]
        %s962 = scalar_lea.vmem [#allocation2], 242
        %v963 = vld [vmem:[%s962] ss:$2 sm:$0xff]
        %s964 = scalar_lea.vmem [#allocation2], 290
        %v965 = vld [vmem:[%s964] ss:$2 sm:$0xff]
        %s966 = scalar_lea.vmem [#allocation2], 338
        %v967 = vld [vmem:[%s966] ss:$2 sm:$0xff]
        %v968 = vpack.c.bf16 %v955, %v953
        %v969 = vpack.c.bf16 %v959, %v957
        %v970 = vpack.c.bf16 %v963, %v961
        %v971 = vpack.c.bf16 %v967, %v965
        %s972 = scalar_lea.vmem [#allocation2], 24
        %v973 = vld [vmem:[%s972] ss:$2 sm:$0xff]
        %s974 = scalar_lea.vmem %s972, 48 [#allocation2]
        %v975 = vld [vmem:[%s974] ss:$2 sm:$0xff]
        %s976 = scalar_lea.vmem %s972, 96 [#allocation2]
        %v977 = vld [vmem:[%s976] ss:$2 sm:$0xff]
        %s978 = scalar_lea.vmem %s972, 144 [#allocation2]
        %v979 = vld [vmem:[%s978] ss:$2 sm:$0xff]
        %s980 = scalar_lea.vmem %s972, 192 [#allocation2]
        %v981 = vld [vmem:[%s980] ss:$2 sm:$0xff]
        %s982 = scalar_lea.vmem %s972, 240 [#allocation2]
        %v983 = vld [vmem:[%s982] ss:$2 sm:$0xff]
        %s984 = scalar_lea.vmem %s972, 288 [#allocation2]
        %v985 = vld [vmem:[%s984] ss:$2 sm:$0xff]
        %s986 = scalar_lea.vmem %s972, 336 [#allocation2]
        %v987 = vld [vmem:[%s986] ss:$2 sm:$0xff]
        %v988 = vpack.c.bf16 %v975, %v973
        %v989 = vpack.c.bf16 %v979, %v977
        %v990 = vpack.c.bf16 %v983, %v981
        %v991 = vpack.c.bf16 %v987, %v985
        %s992 = scalar_lea.vmem %s972, 1 [#allocation2]
        %v993 = vld [vmem:[%s992] ss:$2 sm:$0xff]
        %s994 = scalar_lea.vmem %s972, 49 [#allocation2]
        %v995 = vld [vmem:[%s994] ss:$2 sm:$0xff]
        %s996 = scalar_lea.vmem %s972, 97 [#allocation2]
        %v997 = vld [vmem:[%s996] ss:$2 sm:$0xff]
        %s998 = scalar_lea.vmem %s972, 145 [#allocation2]
        %v999 = vld [vmem:[%s998] ss:$2 sm:$0xff]
        %s1000 = scalar_lea.vmem %s972, 193 [#allocation2]
        %v1001 = vld [vmem:[%s1000] ss:$2 sm:$0xff]
        %s1002 = scalar_lea.vmem %s972, 241 [#allocation2]
        %v1003 = vld [vmem:[%s1002] ss:$2 sm:$0xff]
        %s1004 = scalar_lea.vmem %s972, 289 [#allocation2]
        %v1005 = vld [vmem:[%s1004] ss:$2 sm:$0xff]
        %s1006 = scalar_lea.vmem %s972, 337 [#allocation2]
        %v1007 = vld [vmem:[%s1006] ss:$2 sm:$0xff]
        %v1008 = vpack.c.bf16 %v995, %v993
        %v1009 = vpack.c.bf16 %v999, %v997
        %v1010 = vpack.c.bf16 %v1003, %v1001
        %v1011 = vpack.c.bf16 %v1007, %v1005
        %s1012 = scalar_lea.vmem %s972, 2 [#allocation2]
        %v1013 = vld [vmem:[%s1012] ss:$2 sm:$0xff]
        %s1014 = scalar_lea.vmem %s972, 50 [#allocation2]
        %v1015 = vld [vmem:[%s1014] ss:$2 sm:$0xff]
        %s1016 = scalar_lea.vmem %s972, 98 [#allocation2]
        %v1017 = vld [vmem:[%s1016] ss:$2 sm:$0xff]
        %s1018 = scalar_lea.vmem %s972, 146 [#allocation2]
        %v1019 = vld [vmem:[%s1018] ss:$2 sm:$0xff]
        %s1020 = scalar_lea.vmem %s972, 194 [#allocation2]
        %v1021 = vld [vmem:[%s1020] ss:$2 sm:$0xff]
        %s1022 = scalar_lea.vmem %s972, 242 [#allocation2]
        %v1023 = vld [vmem:[%s1022] ss:$2 sm:$0xff]
        %s1024 = scalar_lea.vmem %s972, 290 [#allocation2]
        %v1025 = vld [vmem:[%s1024] ss:$2 sm:$0xff]
        %s1026 = scalar_lea.vmem %s972, 338 [#allocation2]
        %v1027 = vld [vmem:[%s1026] ss:$2 sm:$0xff]
        %v1028 = vpack.c.bf16 %v1015, %v1013
        %v1029 = vpack.c.bf16 %v1019, %v1017
        %v1030 = vpack.c.bf16 %v1023, %v1021
        %v1031 = vpack.c.bf16 %v1027, %v1025
        %s1032 = scalar_lea.vmem [#allocation2], 48
        %v1033 = vld [vmem:[%s1032] ss:$2 sm:$0xff]
        %s1034 = scalar_lea.vmem %s1032, 48 [#allocation2]
        %v1035 = vld [vmem:[%s1034] ss:$2 sm:$0xff]
        %s1036 = scalar_lea.vmem %s1032, 96 [#allocation2]
        %v1037 = vld [vmem:[%s1036] ss:$2 sm:$0xff]
        %s1038 = scalar_lea.vmem %s1032, 144 [#allocation2]
        %v1039 = vld [vmem:[%s1038] ss:$2 sm:$0xff]
        %s1040 = scalar_lea.vmem %s1032, 192 [#allocation2]
        %v1041 = vld [vmem:[%s1040] ss:$2 sm:$0xff]
        %s1042 = scalar_lea.vmem %s1032, 240 [#allocation2]
        %v1043 = vld [vmem:[%s1042] ss:$2 sm:$0xff]
        %s1044 = scalar_lea.vmem %s1032, 288 [#allocation2]
        %v1045 = vld [vmem:[%s1044] ss:$2 sm:$0xff]
        %s1046 = scalar_lea.vmem %s1032, 336 [#allocation2]
        %v1047 = vld [vmem:[%s1046] ss:$2 sm:$0xff]
        %v1048 = vpack.c.bf16 %v1035, %v1033
        %v1049 = vpack.c.bf16 %v1039, %v1037
        %v1050 = vpack.c.bf16 %v1043, %v1041
        %v1051 = vpack.c.bf16 %v1047, %v1045
        %s1052 = scalar_lea.vmem %s1032, 1 [#allocation2]
        %v1053 = vld [vmem:[%s1052] ss:$2 sm:$0xff]
        %s1054 = scalar_lea.vmem %s1032, 49 [#allocation2]
        %v1055 = vld [vmem:[%s1054] ss:$2 sm:$0xff]
        %s1056 = scalar_lea.vmem %s1032, 97 [#allocation2]
        %v1057 = vld [vmem:[%s1056] ss:$2 sm:$0xff]
        %s1058 = scalar_lea.vmem %s1032, 145 [#allocation2]
        %v1059 = vld [vmem:[%s1058] ss:$2 sm:$0xff]
        %s1060 = scalar_lea.vmem %s1032, 193 [#allocation2]
        %v1061 = vld [vmem:[%s1060] ss:$2 sm:$0xff]
        %s1062 = scalar_lea.vmem %s1032, 241 [#allocation2]
        %v1063 = vld [vmem:[%s1062] ss:$2 sm:$0xff]
        %s1064 = scalar_lea.vmem %s1032, 289 [#allocation2]
        %v1065 = vld [vmem:[%s1064] ss:$2 sm:$0xff]
        %s1066 = scalar_lea.vmem %s1032, 337 [#allocation2]
        %v1067 = vld [vmem:[%s1066] ss:$2 sm:$0xff]
        %v1068 = vpack.c.bf16 %v1055, %v1053
        %v1069 = vpack.c.bf16 %v1059, %v1057
        %v1070 = vpack.c.bf16 %v1063, %v1061
        %v1071 = vpack.c.bf16 %v1067, %v1065
        %s1072 = scalar_lea.vmem %s1032, 2 [#allocation2]
        %v1073 = vld [vmem:[%s1072] ss:$2 sm:$0xff]
        %s1074 = scalar_lea.vmem %s1032, 50 [#allocation2]
        %v1075 = vld [vmem:[%s1074] ss:$2 sm:$0xff]
        %s1076 = scalar_lea.vmem %s1032, 98 [#allocation2]
        %v1077 = vld [vmem:[%s1076] ss:$2 sm:$0xff]
        %s1078 = scalar_lea.vmem %s1032, 146 [#allocation2]
        %v1079 = vld [vmem:[%s1078] ss:$2 sm:$0xff]
        %s1080 = scalar_lea.vmem %s1032, 194 [#allocation2]
        %v1081 = vld [vmem:[%s1080] ss:$2 sm:$0xff]
        %s1082 = scalar_lea.vmem %s1032, 242 [#allocation2]
        %v1083 = vld [vmem:[%s1082] ss:$2 sm:$0xff]
        %s1084 = scalar_lea.vmem %s1032, 290 [#allocation2]
        %v1085 = vld [vmem:[%s1084] ss:$2 sm:$0xff]
        %s1086 = scalar_lea.vmem %s1032, 338 [#allocation2]
        %v1087 = vld [vmem:[%s1086] ss:$2 sm:$0xff]
        %v1088 = vpack.c.bf16 %v1075, %v1073
        %v1089 = vpack.c.bf16 %v1079, %v1077
        %v1090 = vpack.c.bf16 %v1083, %v1081
        %v1091 = vpack.c.bf16 %v1087, %v1085
        %1096 = vrot.lane.b32.xlu0 %v948, 4
        %v1097 = vpop.permute.xlu0 %1096
        %1098 = vrot.lane.b32.xlu0 %v949, 4
        %v1099 = vpop.permute.xlu0 %1098
        %1100 = vrot.lane.b32.xlu0 %v950, 4
        %v1101 = vpop.permute.xlu0 %1100
        %1102 = vrot.lane.b32.xlu0 %v951, 4
        %v1103 = vpop.permute.xlu0 %1102
        %1108 = vrot.lane.b32.xlu0 %v968, 8
        %v1109 = vpop.permute.xlu0 %1108
        %1110 = vrot.lane.b32.xlu0 %v969, 8
        %v1111 = vpop.permute.xlu0 %1110
        %1112 = vrot.lane.b32.xlu0 %v970, 8
        %v1113 = vpop.permute.xlu0 %1112
        %1114 = vrot.lane.b32.xlu0 %v971, 8
        %v1115 = vpop.permute.xlu0 %1114
        %1120 = vrot.lane.b32.xlu0 %v988, 12
        %v1121 = vpop.permute.xlu0 %1120
        %1122 = vrot.lane.b32.xlu0 %v989, 12
        %v1123 = vpop.permute.xlu0 %1122
        %1124 = vrot.lane.b32.xlu0 %v990, 12
        %v1125 = vpop.permute.xlu0 %1124
        %1126 = vrot.lane.b32.xlu0 %v991, 12
        %v1127 = vpop.permute.xlu0 %1126
        %1132 = vrot.lane.b32.xlu0 %v1008, 16
        %v1133 = vpop.permute.xlu0 %1132
        %1134 = vrot.lane.b32.xlu0 %v1009, 16
        %v1135 = vpop.permute.xlu0 %1134
        %1136 = vrot.lane.b32.xlu0 %v1010, 16
        %v1137 = vpop.permute.xlu0 %1136
        %1138 = vrot.lane.b32.xlu0 %v1011, 16
        %v1139 = vpop.permute.xlu0 %1138
        %1144 = vrot.lane.b32.xlu0 %v1028, 20
        %v1145 = vpop.permute.xlu0 %1144
        %1146 = vrot.lane.b32.xlu0 %v1029, 20
        %v1147 = vpop.permute.xlu0 %1146
        %1148 = vrot.lane.b32.xlu0 %v1030, 20
        %v1149 = vpop.permute.xlu0 %1148
        %1150 = vrot.lane.b32.xlu0 %v1031, 20
        %v1151 = vpop.permute.xlu0 %1150
        %1156 = vrot.lane.b32.xlu0 %v1048, 24
        %v1157 = vpop.permute.xlu0 %1156
        %1158 = vrot.lane.b32.xlu0 %v1049, 24
        %v1159 = vpop.permute.xlu0 %1158
        %1160 = vrot.lane.b32.xlu0 %v1050, 24
        %v1161 = vpop.permute.xlu0 %1160
        %1162 = vrot.lane.b32.xlu0 %v1051, 24
        %v1163 = vpop.permute.xlu0 %1162
        %1168 = vrot.lane.b32.xlu0 %v1068, 28
        %v1169 = vpop.permute.xlu0 %1168
        %1170 = vrot.lane.b32.xlu0 %v1069, 28
        %v1171 = vpop.permute.xlu0 %1170
        %1172 = vrot.lane.b32.xlu0 %v1070, 28
        %v1173 = vpop.permute.xlu0 %1172
        %1174 = vrot.lane.b32.xlu0 %v1071, 28
        %v1175 = vpop.permute.xlu0 %1174
        %1180 = vrot.lane.b32.xlu0 %v1088, 32
        %v1181 = vpop.permute.xlu0 %1180
        %1182 = vrot.lane.b32.xlu0 %v1089, 32
        %v1183 = vpop.permute.xlu0 %1182
        %1184 = vrot.lane.b32.xlu0 %v1090, 32
        %v1185 = vpop.permute.xlu0 %1184
        %1186 = vrot.lane.b32.xlu0 %v1091, 32
        %v1187 = vpop.permute.xlu0 %1186
        %v1190 = vsel %vm452, %v928, %v1097
        %v1193 = vsel %vm452, %v929, %v1099
        %v1196 = vsel %vm452, %v930, %v1101
        %v1199 = vsel %vm452, %v931, %v1103
        %vm1200 = vcmask 64512
        %v1202 = vsel %vm1200, %v1190, %v1109
        %v1204 = vsel %vm1200, %v1193, %v1111
        %v1206 = vsel %vm1200, %v1196, %v1113
        %v1208 = vsel %vm1200, %v1199, %v1115
        %vm1209 = vcmask 97280
        %v1211 = vsel %vm1209, %v1202, %v1121
        %v1213 = vsel %vm1209, %v1204, %v1123
        %v1215 = vsel %vm1209, %v1206, %v1125
        %v1217 = vsel %vm1209, %v1208, %v1127
        %vm1218 = vcmask 130048
        %v1220 = vsel %vm1218, %v1211, %v1133
        %v1222 = vsel %vm1218, %v1213, %v1135
        %v1224 = vsel %vm1218, %v1215, %v1137
        %v1226 = vsel %vm1218, %v1217, %v1139
        %vm1227 = vcmask 162816
        %v1229 = vsel %vm1227, %v1220, %v1145
        %v1231 = vsel %vm1227, %v1222, %v1147
        %v1233 = vsel %vm1227, %v1224, %v1149
        %v1235 = vsel %vm1227, %v1226, %v1151
        %vm1236 = vcmask 195584
        %v1238 = vsel %vm1236, %v1229, %v1157
        %v1240 = vsel %vm1236, %v1231, %v1159
        %v1242 = vsel %vm1236, %v1233, %v1161
        %v1244 = vsel %vm1236, %v1235, %v1163
        %vm1245 = vcmask 228352
        %v1247 = vsel %vm1245, %v1238, %v1169
        %v1249 = vsel %vm1245, %v1240, %v1171
        %v1251 = vsel %vm1245, %v1242, %v1173
        %v1253 = vsel %vm1245, %v1244, %v1175
        %vm1254 = vcmask 261120
        %v1256 = vsel %vm1254, %v1247, %v1181
        %v1258 = vsel %vm1254, %v1249, %v1183
        %v1260 = vsel %vm1254, %v1251, %v1185
        %v1262 = vsel %vm1254, %v1253, %v1187
        %v1263 = vld [vmem:[%s3] sm:$0xf]
        %v1264 = vld [vmem:[%s3 + $0x4] sm:$0xf]
        %v1265 = vld [vmem:[%s3 + $0x8] sm:$0xf]
        %v1266 = vld [vmem:[%s3 + $0xc] sm:$0xf]
        %v1267 = vld [vmem:[%s3 + $0x10] sm:$0x3]
        %v1268 = vld [vmem:[%s4] sm:$0x1]
        %v1270 = vlaneseq
        %v1271 = vshrl.u32 %v1270, 7
        %v1272 = vsub.s32 0, %v1271
        %v1273 = vrot.slane %v1268, %v1272
        %v1280 = vunpack.c.l.b16 %v1263
        %v1281 = vunpack.c.l.b16 %v1264
        %v1282 = vunpack.c.l.b16 %v1265
        %v1283 = vunpack.c.l.b16 %v1266
        %v1284 = vunpack.c.l.b16 %v1267
        %v1285 = vpack.c.b16 %v1281, %v1280
        %v1286 = vpack.c.b16 %v1283, %v1282
        %v1287 = vpack.c.b16 %v1284, %v1284
        %vm1290 = vcmask 293888
        %v1291 = vsel %vm1290, %v1256, 0
        %v1293 = vsel %vm1290, %v1258, 0
        %v1295 = vsel %vm1290, %v1260, 0
        %v1297 = vsel %vm1290, %v1262, 0
        %v1300 = vsel %vm501, %v1287, 0
        %1302 = vmatprep.subr.bf16.mxu0 0
        %1303 = vmatpush1.bf16.msra.mxu0 %v1285
        %1304 = vmatprep.subr.bf16.mxu0 0
        %1305 = vmatpush1.bf16.msra.mxu0 %v1286
        %1306 = vmatprep.subr.bf16.mxu0 0
        %1307 = vmatpush1.bf16.msra.mxu0 %v1300
        %1308 = vmatprep.subr.bf16.mxu0 0
        %1309 = vmatpush1.bf16.msra.mxu0 0
        %1310 = vmatprep.subr.bf16.mxu0 0
        %1311 = vmatpush1.bf16.msra.mxu0 0
        %1312 = vmatprep.subr.bf16.mxu0 0
        %1313 = vmatpush1.bf16.msra.mxu0 0
        %1314 = vmatprep.subr.bf16.mxu0 0
        %1315 = vmatpush1.bf16.msra.mxu0 0
        %1316 = vmatprep.subr.bf16.mxu0 0
        %1317 = vmatpush1.bf16.msra.mxu0 0
        %1318 = vmatprep.subr.bf16.mxu0 0
        %1319 = vmatpush1.bf16.msra.mxu0 0
        %1320 = vmatprep.subr.bf16.mxu0 0
        %1321 = vmatpush1.bf16.msra.mxu0 0
        %1322 = vmatprep.subr.bf16.mxu0 0
        %1323 = vmatpush1.bf16.msra.mxu0 0
        %1324 = vmatprep.subr.bf16.mxu0 0
        %1325 = vmatpush1.bf16.msra.mxu0 0
        %1326 = vmatprep.subr.bf16.mxu0 0
        %1327 = vmatpush1.bf16.msra.mxu0 0
        %1328 = vmatprep.subr.bf16.mxu0 0
        %1329 = vmatpush1.bf16.msra.mxu0 0
        %1330 = vmatprep.subr.bf16.mxu0 0
        %1331 = vmatpush1.bf16.msra.mxu0 0
        %1332 = vmatprep.subr.bf16.mxu0 0
        %1333 = vmatpush1.bf16.msra.mxu0 0
        %1334 = vmatprep.mubr.bf16.mxu0 0
        %1335 = vmatmul.mubr.bf16.gmra.mrb[0].mxu0 %v1291
        %v1336 = vpop.f32.mrb[0].mxu0
        %v1337 = vadd.f32 %v1273, %v1336
        %v1338 = vpop.f32.mrb[0].mxu0
        %v1339 = vpop.f32.mrb[0].mxu0
        %v1340 = vadd.f32 %v1273, %v1339
        %v1341 = vpop.f32.mrb[0].mxu0
        %1342 = vmatprep.mubr.bf16.mxu0 0
        %1343 = vmatmul.mubr.bf16.gmra.mrb[0].mxu0 %v1293
        %v1344 = vpop.f32.mrb[0].mxu0
        %v1345 = vadd.f32 %v1273, %v1344
        %v1346 = vpop.f32.mrb[0].mxu0
        %v1347 = vpop.f32.mrb[0].mxu0
        %v1348 = vadd.f32 %v1273, %v1347
        %v1349 = vpop.f32.mrb[0].mxu0
        %1350 = vmatprep.mubr.bf16.mxu0 0
        %1351 = vmatmul.mubr.bf16.gmra.mrb[0].mxu0 %v1295
        %v1352 = vpop.f32.mrb[0].mxu0
        %v1353 = vadd.f32 %v1273, %v1352
        %v1354 = vpop.f32.mrb[0].mxu0
        %v1355 = vpop.f32.mrb[0].mxu0
        %v1356 = vadd.f32 %v1273, %v1355
        %v1357 = vpop.f32.mrb[0].mxu0
        %1358 = vmatprep.mubr.bf16.mxu0 0
        %1359 = vmatmul.mubr.bf16.gmra.mrb[0].mxu0 %v1297
        %v1360 = vpop.f32.mrb[0].mxu0
        %v1361 = vadd.f32 %v1273, %v1360
        %v1362 = vpop.f32.mrb[0].mxu0
        %v1363 = vpop.f32.mrb[0].mxu0
        %v1364 = vadd.f32 %v1273, %v1363
        %v1365 = vpop.f32.mrb[0].mxu0
        %1366 = vdwg.mxu0
        %v1367 = vmax.f32 %v1337, 0.0
        %v1368 = vmax.f32 %v1340, 0.0
        %v1369 = vmax.f32 %v1345, 0.0
        %v1370 = vmax.f32 %v1348, 0.0
        %v1371 = vmax.f32 %v1353, 0.0
        %v1372 = vmax.f32 %v1356, 0.0
        %v1373 = vmax.f32 %v1361, 0.0
        %v1374 = vmax.f32 %v1364, 0.0
        %v1375 = vpack.c.bf16 %v1368, %v1367
        %v1376 = vpack.c.bf16 %v1370, %v1369
        %v1377 = vpack.c.bf16 %v1372, %v1371
        %v1378 = vpack.c.bf16 %v1374, %v1373
        %v1379 = vld [vmem:[%s5] sm:$0x3]
        %v1380 = vld [vmem:[%s6] sm:$0x1]
        %v1382 = vlaneseq
        %v1383 = vshrl.u32 %v1382, 7
        %v1384 = vsub.s32 0, %v1383
        %v1385 = vrot.slane %v1380, %v1384
        %v1388 = vsel %vm452, %v1375, 0
        %v1391 = vsel %vm452, %v1376, 0
        %v1394 = vsel %vm452, %v1377, 0
        %v1397 = vsel %vm452, %v1378, 0
        %v1400 = vsel %vm501, %v1379, 0
        %1402 = vmatprep.subr.bf16.mxu0 0
        %1403 = vmatpush1.bf16.msra.mxu0 %v1400
        %1404 = vmatprep.subr.bf16.mxu0 0
        %1405 = vmatpush1.bf16.msra.mxu0 0
        %1406 = vmatprep.subr.bf16.mxu0 0
        %1407 = vmatpush1.bf16.msra.mxu0 0
        %1408 = vmatprep.subr.bf16.mxu0 0
        %1409 = vmatpush1.bf16.msra.mxu0 0
        %1410 = vmatprep.subr.bf16.mxu0 0
        %1411 = vmatpush1.bf16.msra.mxu0 0
        %1412 = vmatprep.subr.bf16.mxu0 0
        %1413 = vmatpush1.bf16.msra.mxu0 0
        %1414 = vmatprep.subr.bf16.mxu0 0
        %1415 = vmatpush1.bf16.msra.mxu0 0
        %1416 = vmatprep.subr.bf16.mxu0 0
        %1417 = vmatpush1.bf16.msra.mxu0 0
        %1418 = vmatprep.subr.bf16.mxu0 0
        %1419 = vmatpush1.bf16.msra.mxu0 0
        %1420 = vmatprep.subr.bf16.mxu0 0
        %1421 = vmatpush1.bf16.msra.mxu0 0
        %1422 = vmatprep.subr.bf16.mxu0 0
        %1423 = vmatpush1.bf16.msra.mxu0 0
        %1424 = vmatprep.subr.bf16.mxu0 0
        %1425 = vmatpush1.bf16.msra.mxu0 0
        %1426 = vmatprep.subr.bf16.mxu0 0
        %1427 = vmatpush1.bf16.msra.mxu0 0
        %1428 = vmatprep.subr.bf16.mxu0 0
        %1429 = vmatpush1.bf16.msra.mxu0 0
        %1430 = vmatprep.subr.bf16.mxu0 0
        %1431 = vmatpush1.bf16.msra.mxu0 0
        %1432 = vmatprep.subr.bf16.mxu0 0
        %1433 = vmatpush1.bf16.msra.mxu0 0
        %1434 = vmatprep.mubr.bf16.mxu0 0
        %1435 = vmatmul.mubr.bf16.gmra.mrb[0].mxu0 %v1388
        %v1436 = vpop.f32.mrb[0].mxu0
        %v1437 = vadd.f32 %v1385, %v1436
        %v1438 = vpop.f32.mrb[0].mxu0
        %v1439 = vpop.f32.mrb[0].mxu0
        %v1440 = vadd.f32 %v1385, %v1439
        %v1441 = vpop.f32.mrb[0].mxu0
        %1442 = vmatprep.mubr.bf16.mxu0 0
        %1443 = vmatmul.mubr.bf16.gmra.mrb[0].mxu0 %v1391
        %v1444 = vpop.f32.mrb[0].mxu0
        %v1445 = vadd.f32 %v1385, %v1444
        %v1446 = vpop.f32.mrb[0].mxu0
        %v1447 = vpop.f32.mrb[0].mxu0
        %v1448 = vadd.f32 %v1385, %v1447
        %v1449 = vpop.f32.mrb[0].mxu0
        %1450 = vmatprep.mubr.bf16.mxu0 0
        %1451 = vmatmul.mubr.bf16.gmra.mrb[0].mxu0 %v1394
        %v1452 = vpop.f32.mrb[0].mxu0
        %v1453 = vadd.f32 %v1385, %v1452
        %v1454 = vpop.f32.mrb[0].mxu0
        %v1455 = vpop.f32.mrb[0].mxu0
        %v1456 = vadd.f32 %v1385, %v1455
        %v1457 = vpop.f32.mrb[0].mxu0
        %1458 = vmatprep.mubr.bf16.mxu0 0
        %1459 = vmatmul.mubr.bf16.gmra.mrb[0].mxu0 %v1397
        %v1460 = vpop.f32.mrb[0].mxu0
        %v1461 = vadd.f32 %v1385, %v1460
        %v1462 = vpop.f32.mrb[0].mxu0
        %v1463 = vpop.f32.mrb[0].mxu0
        %v1464 = vadd.f32 %v1385, %v1463
        %v1465 = vpop.f32.mrb[0].mxu0
        %1466 = vdwg.mxu0
        %v1467 = vunpack.c.l.bf16 %v332
        %v1468 = vunpack.c.l.bf16 %v333
        %v1469 = vunpack.c.l.bf16 %v334
        %v1470 = vunpack.c.l.bf16 %v335
        %v1471 = vunpack.c.l.bf16 %v336
        %v1472 = vunpack.c.l.bf16 %v337
        %v1473 = vunpack.c.l.bf16 %v338
        %v1474 = vunpack.c.l.bf16 %v339
        %v1475 = vunpack.c.l.bf16 %v340
        %v1476 = vunpack.c.l.bf16 %v341
        %v1477 = vunpack.c.l.bf16 %v342
        %v1478 = vunpack.c.l.bf16 %v343
        %v1479 = vunpack.c.l.bf16 %v344
        %v1480 = vunpack.c.l.bf16 %v345
        %v1481 = vunpack.c.l.bf16 %v346
        %v1482 = vunpack.c.l.bf16 %v347
        %v1483 = vunpack.c.l.bf16 %v348
        %v1484 = vunpack.c.l.bf16 %v349
        %v1485 = vunpack.c.l.bf16 %v350
        %v1486 = vunpack.c.l.bf16 %v351
        %v1487 = vunpack.c.l.bf16 %v352
        %v1488 = vunpack.c.l.bf16 %v353
        %v1489 = vunpack.c.l.bf16 %v354
        %v1490 = vunpack.c.l.bf16 %v355
        %v1491 = vunpack.c.l.bf16 %v356
        %v1492 = vunpack.c.l.bf16 %v357
        %v1493 = vunpack.c.l.bf16 %v358
        %v1494 = vunpack.c.l.bf16 %v359
        %v1495 = vunpack.c.l.bf16 %v360
        %v1496 = vunpack.c.l.bf16 %v361
        %v1497 = vunpack.c.l.bf16 %v362
        %v1498 = vunpack.c.l.bf16 %v363
        %1499 = vst.msk [vmem:[#allocation3] sm:$0xff] %vm452, %v1467
        %1500 = vst.msk [vmem:[#allocation3 + $0x8] sm:$0xff] %vm452, %v1468
        %1501 = vst.msk [vmem:[#allocation3 + $0x10] sm:$0xff] %vm452, %v1469
        %1502 = vst.msk [vmem:[#allocation3 + $0x18] sm:$0xff] %vm452, %v1470
        %1503 = vst.msk [vmem:[#allocation3 + $0x20] sm:$0xff] %vm452, %v1471
        %1504 = vst.msk [vmem:[#allocation3 + $0x28] sm:$0xff] %vm452, %v1472
        %1505 = vst.msk [vmem:[#allocation3 + $0x30] sm:$0xff] %vm452, %v1473
        %1506 = vst.msk [vmem:[#allocation3 + $0x38] sm:$0xff] %vm452, %v1474
        %1507 = vst.msk [vmem:[#allocation3 + $0x40] sm:$0xff] %vm452, %v1475
        %1508 = vst.msk [vmem:[#allocation3 + $0x48] sm:$0xff] %vm452, %v1476
        %1509 = vst.msk [vmem:[#allocation3 + $0x50] sm:$0xff] %vm452, %v1477
        %1510 = vst.msk [vmem:[#allocation3 + $0x58] sm:$0xff] %vm452, %v1478
        %1511 = vst.msk [vmem:[#allocation3 + $0x60] sm:$0xff] %vm452, %v1479
        %1512 = vst.msk [vmem:[#allocation3 + $0x68] sm:$0xff] %vm452, %v1480
        %1513 = vst.msk [vmem:[#allocation3 + $0x70] sm:$0xff] %vm452, %v1481
        %1514 = vst.msk [vmem:[#allocation3 + $0x78] sm:$0xff] %vm452, %v1482
        %1515 = vst.msk [vmem:[#allocation3 + $0x80] sm:$0xff] %vm452, %v1483
        %1516 = vst.msk [vmem:[#allocation3 + $0x88] sm:$0xff] %vm452, %v1484
        %1517 = vst.msk [vmem:[#allocation3 + $0x90] sm:$0xff] %vm452, %v1485
        %1518 = vst.msk [vmem:[#allocation3 + $0x98] sm:$0xff] %vm452, %v1486
        %1519 = vst.msk [vmem:[#allocation3 + $0xa0] sm:$0xff] %vm452, %v1487
        %1520 = vst.msk [vmem:[#allocation3 + $0xa8] sm:$0xff] %vm452, %v1488
        %1521 = vst.msk [vmem:[#allocation3 + $0xb0] sm:$0xff] %vm452, %v1489
        %1522 = vst.msk [vmem:[#allocation3 + $0xb8] sm:$0xff] %vm452, %v1490
        %1523 = vst.msk [vmem:[#allocation3 + $0xc0] sm:$0xff] %vm452, %v1491
        %1524 = vst.msk [vmem:[#allocation3 + $0xc8] sm:$0xff] %vm452, %v1492
        %1525 = vst.msk [vmem:[#allocation3 + $0xd0] sm:$0xff] %vm452, %v1493
        %1526 = vst.msk [vmem:[#allocation3 + $0xd8] sm:$0xff] %vm452, %v1494
        %1527 = vst.msk [vmem:[#allocation3 + $0xe0] sm:$0xff] %vm452, %v1495
        %1528 = vst.msk [vmem:[#allocation3 + $0xe8] sm:$0xff] %vm452, %v1496
        %1529 = vst.msk [vmem:[#allocation3 + $0xf0] sm:$0xff] %vm452, %v1497
        %1530 = vst.msk [vmem:[#allocation3 + $0xf8] sm:$0xff] %vm452, %v1498
        %v1531 = vld [vmem:[#allocation3] ss:$2 sm:$0xff]
        %s1532 = scalar_lea.vmem [#allocation3], 32
        %v1533 = vld [vmem:[%s1532] ss:$2 sm:$0xff]
        %s1534 = scalar_lea.vmem [#allocation3], 64
        %v1535 = vld [vmem:[%s1534] ss:$2 sm:$0xff]
        %s1536 = scalar_lea.vmem [#allocation3], 96
        %v1537 = vld [vmem:[%s1536] ss:$2 sm:$0xff]
        %s1538 = scalar_lea.vmem [#allocation3], 128
        %v1539 = vld [vmem:[%s1538] ss:$2 sm:$0xff]
        %s1540 = scalar_lea.vmem [#allocation3], 160
        %v1541 = vld [vmem:[%s1540] ss:$2 sm:$0xff]
        %s1542 = scalar_lea.vmem [#allocation3], 192
        %v1543 = vld [vmem:[%s1542] ss:$2 sm:$0xff]
        %s1544 = scalar_lea.vmem [#allocation3], 224
        %v1545 = vld [vmem:[%s1544] ss:$2 sm:$0xff]
        %v1546 = vpack.c.bf16 %v1533, %v1531
        %v1547 = vpack.c.bf16 %v1537, %v1535
        %v1548 = vpack.c.bf16 %v1541, %v1539
        %v1549 = vpack.c.bf16 %v1545, %v1543
        %v1550 = vld [vmem:[%s7] sm:$0x3]
        %v1551 = vld [vmem:[%s8] sm:$0x1]
        %v1553 = vlaneseq
        %v1554 = vshrl.u32 %v1553, 7
        %v1555 = vsub.s32 0, %v1554
        %v1556 = vrot.slane %v1551, %v1555
        %v1559 = vsel %vm452, %v1546, 0
        %v1562 = vsel %vm452, %v1547, 0
        %v1565 = vsel %vm452, %v1548, 0
        %v1568 = vsel %vm452, %v1549, 0
        %v1571 = vsel %vm501, %v1550, 0
        %1573 = vmatprep.subr.bf16.mxu0 0
        %1574 = vmatpush1.bf16.msra.mxu0 %v1571
        %1575 = vmatprep.subr.bf16.mxu0 0
        %1576 = vmatpush1.bf16.msra.mxu0 0
        %1577 = vmatprep.subr.bf16.mxu0 0
        %1578 = vmatpush1.bf16.msra.mxu0 0
        %1579 = vmatprep.subr.bf16.mxu0 0
        %1580 = vmatpush1.bf16.msra.mxu0 0
        %1581 = vmatprep.subr.bf16.mxu0 0
        %1582 = vmatpush1.bf16.msra.mxu0 0
        %1583 = vmatprep.subr.bf16.mxu0 0
        %1584 = vmatpush1.bf16.msra.mxu0 0
        %1585 = vmatprep.subr.bf16.mxu0 0
        %1586 = vmatpush1.bf16.msra.mxu0 0
        %1587 = vmatprep.subr.bf16.mxu0 0
        %1588 = vmatpush1.bf16.msra.mxu0 0
        %1589 = vmatprep.subr.bf16.mxu0 0
        %1590 = vmatpush1.bf16.msra.mxu0 0
        %1591 = vmatprep.subr.bf16.mxu0 0
        %1592 = vmatpush1.bf16.msra.mxu0 0
        %1593 = vmatprep.subr.bf16.mxu0 0
        %1594 = vmatpush1.bf16.msra.mxu0 0
        %1595 = vmatprep.subr.bf16.mxu0 0
        %1596 = vmatpush1.bf16.msra.mxu0 0
        %1597 = vmatprep.subr.bf16.mxu0 0
        %1598 = vmatpush1.bf16.msra.mxu0 0
        %1599 = vmatprep.subr.bf16.mxu0 0
        %1600 = vmatpush1.bf16.msra.mxu0 0
        %1601 = vmatprep.subr.bf16.mxu0 0
        %1602 = vmatpush1.bf16.msra.mxu0 0
        %1603 = vmatprep.subr.bf16.mxu0 0
        %1604 = vmatpush1.bf16.msra.mxu0 0
        %1605 = vmatprep.mubr.bf16.mxu0 0
        %1606 = vmatmul.mubr.bf16.gmra.mrb[0].mxu0 %v1559
        %v1607 = vpop.f32.mrb[0].mxu0
        %v1608 = vadd.f32 %v1556, %v1607
        %v1609 = vpop.f32.mrb[0].mxu0
        %v1610 = vpop.f32.mrb[0].mxu0
        %v1611 = vadd.f32 %v1556, %v1610
        %v1612 = vpop.f32.mrb[0].mxu0
        %1613 = vmatprep.mubr.bf16.mxu0 0
        %1614 = vmatmul.mubr.bf16.gmra.mrb[0].mxu0 %v1562
        %v1615 = vpop.f32.mrb[0].mxu0
        %v1616 = vadd.f32 %v1556, %v1615
        %v1617 = vpop.f32.mrb[0].mxu0
        %v1618 = vpop.f32.mrb[0].mxu0
        %v1619 = vadd.f32 %v1556, %v1618
        %v1620 = vpop.f32.mrb[0].mxu0
        %1621 = vmatprep.mubr.bf16.mxu0 0
        %1622 = vmatmul.mubr.bf16.gmra.mrb[0].mxu0 %v1565
        %v1623 = vpop.f32.mrb[0].mxu0
        %v1624 = vadd.f32 %v1556, %v1623
        %v1625 = vpop.f32.mrb[0].mxu0
        %v1626 = vpop.f32.mrb[0].mxu0
        %v1627 = vadd.f32 %v1556, %v1626
        %v1628 = vpop.f32.mrb[0].mxu0
        %1629 = vmatprep.mubr.bf16.mxu0 0
        %1630 = vmatmul.mubr.bf16.gmra.mrb[0].mxu0 %v1568
        %v1631 = vpop.f32.mrb[0].mxu0
        %v1632 = vadd.f32 %v1556, %v1631
        %v1633 = vpop.f32.mrb[0].mxu0
        %v1634 = vpop.f32.mrb[0].mxu0
        %v1635 = vadd.f32 %v1556, %v1634
        %v1636 = vpop.f32.mrb[0].mxu0
        %1637 = vdwg.mxu0
        %v1638 = vadd.f32 %v1437, %v1608
        %v1639 = vadd.f32 %v1440, %v1611
        %v1640 = vadd.f32 %v1445, %v1616
        %v1641 = vadd.f32 %v1448, %v1619
        %v1642 = vadd.f32 %v1453, %v1624
        %v1643 = vadd.f32 %v1456, %v1627
        %v1644 = vadd.f32 %v1461, %v1632
        %v1645 = vadd.f32 %v1464, %v1635
        %v1646 = vmax.f32 %v1638, 0.0
        %v1647 = vmax.f32 %v1639, 0.0
        %v1648 = vmax.f32 %v1640, 0.0
        %v1649 = vmax.f32 %v1641, 0.0
        %v1650 = vmax.f32 %v1642, 0.0
        %v1651 = vmax.f32 %v1643, 0.0
        %v1652 = vmax.f32 %v1644, 0.0
        %v1653 = vmax.f32 %v1645, 0.0
        %1654 = vst.msk [vmem:[%s325] sm:$0xff] %vm1218, %v1646
        %1655 = vst.msk [vmem:[%s325 + $0x8] sm:$0xff] %vm1218, %v1647
        %1656 = vst.msk [vmem:[%s325 + $0x10] sm:$0xff] %vm1218, %v1648
        %1657 = vst.msk [vmem:[%s325 + $0x18] sm:$0xff] %vm1218, %v1649
        %1658 = vst.msk [vmem:[%s325 + $0x20] sm:$0xff] %vm1218, %v1650
        %1659 = vst.msk [vmem:[%s325 + $0x28] sm:$0xff] %vm1218, %v1651
        %1660 = vst.msk [vmem:[%s325 + $0x30] sm:$0xff] %vm1218, %v1652
        %1661 = vst.msk [vmem:[%s325 + $0x38] sm:$0xff] %vm1218, %v1653
        %s1662 = sand.u32 %s225, 1
        %s1663 = scalar_lea.sflag [#allocation5], %s1662
        %s1664 = sand.u32 %s225, 1
        %s1665 = smul.addr %s1664, 64
        %s1666 = scalar_lea.vmem [#allocation4], %s1665
        // Predicated region
        $region57: #{bottleneck_forward.1} parent=55 // pred_check
          %p1667 = pneg %p235
        $region58: #{bottleneck_forward.1} parent=55 // pred_check_branch
          %1669 = sbr.rel (%p1667) target = $region60
        $region59: #{bottleneck_forward.1} parent=55 // pred_region
          %s1671 = ssub.s32 1024, 1024
          %1672 = vsyncadd %s1663, %s1671
          %s1673 = smul.addr %s23, 8
          %s1674 = smul.addr %s1673, 128
          %s1675 = scalar_lea.hbm %s9, %s1674
          %s1676 = sshll.u32 %s1666, 4
          %s1677 = int_to_ptr.vmem [resolvable:$true] %s1676
          %1682 = dma.vmem_to_hbm [thread:$0]  %s1677, 1024, %s1675, %s1663, 128, 128, 8
        $region60: #{bottleneck_forward.1} parent=55 // pred_fallthru
          _
      $region56: #{bottleneck_forward.1} parent=5 // pred_fallthru
        _
      %p1683 = scmp.le.s32.totalorder 2, %s18
      // Predicated region
      $region61: #{bottleneck_forward.1} parent=5 // pred_check
        %p1684 = pneg %p1683
      $region62: #{bottleneck_forward.1} parent=5 // pred_check_branch
        %1686 = sbr.rel (%p1684) target = $region64
      $region63: #{bottleneck_forward.1} parent=5 // pred_region
        %s1687 = ssub.s32 %s18, 2
        // Predicated region
        $region65: #{bottleneck_forward.1} parent=63 // pred_check
          %p1688 = pneg %p241
        $region66: #{bottleneck_forward.1} parent=63 // pred_check_branch
          %1690 = sbr.rel (%p1688) target = $region68
        $region67: #{bottleneck_forward.1} parent=63 // pred_region
          %s1691 = sand.u32 %s226, 1
          %s1692 = scalar_lea.sflag [#allocation5], %s1691
          %s1693 = sand.u32 %s226, 1
          %s1694 = smul.addr %s1693, 64
          %s1695 = scalar_lea.vmem [#allocation4], %s1694
          %1696 = dma.done %s1692, 1024
        $region68: #{bottleneck_forward.1} parent=63 // pred_fallthru
          _
      $region64: #{bottleneck_forward.1} parent=5 // pred_fallthru
        _
    $region6: #{bottleneck_forward.1} parent=1 // loop_footer
      %s22 = sadd.s32 1, %s18
    $region7: #{bottleneck_forward.1} parent=1 // loop_footer_branch
      %17 = sbr.rel target = $region3
    $region8: #{bottleneck_forward.1} parent=1 // loop_exit
      _
    %1697 = vsyncpa [#allocation5], 1
    %s1698 = scalar_lea.sflag [#allocation5], 1
    %1699 = vsyncpa %s1698, 1

</llo_original>
